<compile_context>
chip_gen: v7x
topology: tpu7x:2x2x1
jax: 0.10.0
libtpu: 0.0.40
codegen_flags: <defaults>
</compile_context>

<pallas_src>
import functools

import jax
import jax.numpy as jnp
from jax.experimental import pallas as pl
from jax.experimental.pallas import tpu as pltpu

VOCAB = 4      # input_size
EMB = 10       # embedding_size
HID = 8        # hidden_size
NCLASS = 4     # num_class
NLAYERS = 2    # num_layers

# ---- packed-weight slab layout (row offsets into a single (SLAB_ROWS, SLAB_COLS) f32) ----
SLAB_COLS = EMB                    # 10 = widest tensor (embedding table rows)
R_EMB = 0                          # (VOCAB, EMB)   embedding table
R_WIH0 = R_EMB + VOCAB             # (EMB, HID)     weight_ih_l0^T
R_WHH0 = R_WIH0 + EMB              # (HID, HID)     weight_hh_l0^T
R_B0 = R_WHH0 + HID                # (1, HID)       b_ih_l0 + b_hh_l0
R_WIH1 = R_B0 + 1                  # (HID, HID)     weight_ih_l1^T
R_WHH1 = R_WIH1 + HID              # (HID, HID)     weight_hh_l1^T
R_B1 = R_WHH1 + HID                # (1, HID)       b_ih_l1 + b_hh_l1
R_FCW = R_B1 + 1                   # (HID, NCLASS)  fc.weight^T
R_FCB = R_FCW + HID                # (1, NCLASS)    fc.bias
SLAB_ROWS = R_FCB + 1              # 49


def rnn_kernel(ids_ref, w_ref, out_ref, h0s_ref, h1s_ref, *, B, T):
    """Whole model. ids_ref: (T*B, 1) int32 time-major. w_ref: (49, 10) packed weights.
    out_ref: (T*B, NCLASS) time-major logits. h0s/h1s: (T*B, HID) VMEM scratch."""
    TB = T * B

    # Unpack the weight slab once (static slices, outside all loops).
    w = w_ref[...]
    embw = w[R_EMB:R_EMB + VOCAB, :EMB]          # (V, E)
    wih0 = w[R_WIH0:R_WIH0 + EMB, :HID]          # (E, H)
    whh0 = w[R_WHH0:R_WHH0 + HID, :HID]          # (H, H)
    b0 = w[R_B0:R_B0 + 1, :HID]                  # (1, H)
    wih1 = w[R_WIH1:R_WIH1 + HID, :HID]          # (H, H)
    whh1 = w[R_WHH1:R_WHH1 + HID, :HID]          # (H, H)
    b1 = w[R_B1:R_B1 + 1, :HID]                  # (1, H)
    fcw = w[R_FCW:R_FCW + HID, :NCLASS]          # (H, C)
    fcb = w[R_FCB:R_FCB + 1, :NCLASS]            # (1, C)

    # Embedding lookup: build the one-hot in-kernel from int ids, then one batched matmul
    # over all B*T tokens (exact gather semantics).
    ids = ids_ref[...]                                               # (TB, 1) int32
    iota = jax.lax.broadcasted_iota(jnp.int32, (TB, VOCAB), 1)
    onehot = (iota == ids).astype(jnp.float32)                       # (TB, V)
    xemb = jnp.dot(onehot, embw, preferred_element_type=jnp.float32)  # (TB, E)

    # ---- Layer 0: batch the input projection (+ bias) across all timesteps ----
    pre0 = jnp.dot(xemb, wih0, preferred_element_type=jnp.float32) + b0   # (TB, H)
    h = jnp.zeros((B, HID), jnp.float32)          # initial hidden state is zeros
    for t in range(T):                            # only h @ Whh + tanh on the serial path
        h = jnp.tanh(pre0[t * B:(t + 1) * B, :] +
                     jnp.dot(h, whh0, preferred_element_type=jnp.float32))
        h0s_ref[t * B:(t + 1) * B, :] = h         # stage into VMEM scratch

    # ---- Layer 1: batched input projection of the whole layer-0 sequence ----
    pre1 = jnp.dot(h0s_ref[...], wih1, preferred_element_type=jnp.float32) + b1  # (TB, H)
    h = jnp.zeros((B, HID), jnp.float32)
    for t in range(T):
        h = jnp.tanh(pre1[t * B:(t + 1) * B, :] +
                     jnp.dot(h, whh1, preferred_element_type=jnp.float32))
        h1s_ref[t * B:(t + 1) * B, :] = h

    # ---- FC head: one batched matmul, one contiguous 2-D store ----
    out_ref[...] = (jnp.dot(h1s_ref[...], fcw, preferred_element_type=jnp.float32)
                    + fcb)                        # (TB, C)


def init_params(key):
    """Deterministic parameters matching PyTorch init distributions."""
    ks = jax.random.split(key, 11)
    s = 1.0 / jnp.sqrt(HID)
    u = lambda k, shape: jax.random.uniform(k, shape, jnp.float32, -s, s)
    return {
        "emb_w": jax.random.normal(ks[0], (VOCAB, EMB), jnp.float32),  # Embedding ~ N(0,1)
        "wih0": u(ks[1], (EMB, HID)),        # weight_ih_l0^T
        "whh0": u(ks[2], (HID, HID)),        # weight_hh_l0^T
        "b0":   u(ks[3], (1, HID)) + u(ks[4], (1, HID)),    # b_ih_l0 + b_hh_l0
        "wih1": u(ks[5], (HID, HID)),        # weight_ih_l1^T
        "whh1": u(ks[6], (HID, HID)),        # weight_hh_l1^T
        "b1":   u(ks[7], (1, HID)) + u(ks[8], (1, HID)),    # independent samples (bug fix)
        "fc_w": u(ks[9], (HID, NCLASS)),     # Linear weight^T
        "fc_b": u(ks[10], (1, NCLASS)),
    }


def pack_params(p):
    """Pack all weights/biases into one (SLAB_ROWS, SLAB_COLS) f32 slab (done once)."""
    def pad_cols(a):
        return jnp.pad(a, ((0, 0), (0, SLAB_COLS - a.shape[1])))
    slab = jnp.concatenate(
        [pad_cols(p[k]) for k in
         ("emb_w", "wih0", "whh0", "b0", "wih1", "whh1", "b1", "fc_w", "fc_b")],
        axis=0)
    assert slab.shape == (SLAB_ROWS, SLAB_COLS)
    return slab


def forward(x_ids, slab):
    """x_ids: (B, T) int token ids -> (B*T, NCLASS) logits (same as PyTorch .view)."""
    B, T = x_ids.shape
    # Time-major ids so every per-timestep slice inside the kernel is contiguous.
    ids_tb = x_ids.astype(jnp.int32).T.reshape(T * B, 1)
    vmem = pl.BlockSpec(memory_space=pltpu.MemorySpace.VMEM)
    # NOTE: at these sizes a single TensorCore invocation is optimal.  If B scales up,
    # add a grid over the batch dim (block B in multiples of 8, weights via index_map
    # -> (0, 0)) marked "parallel" to engage v7x's second TensorCore.
    y_tb = pl.pallas_call(
        functools.partial(rnn_kernel, B=B, T=T),
        out_shape=jax.ShapeDtypeStruct((T * B, NCLASS), jnp.float32),
        in_specs=[vmem, vmem],
        out_specs=vmem,
        scratch_shapes=[pltpu.VMEM((T * B, HID), jnp.float32),
                        pltpu.VMEM((T * B, HID), jnp.float32)],
    )(ids_tb, slab)
    # Reorder time-major -> batch-major and flatten, matching x.view(-1, num_class).
    return y_tb.reshape(T, B, NCLASS).transpose(1, 0, 2).reshape(B * T, NCLASS)


def forward_ref(x_ids, params):
    """Pure-JAX reference for correctness checking."""
    B, T = x_ids.shape
    emb = params["emb_w"][x_ids]                        # (B, T, E)
    h0 = jnp.zeros((B, HID), jnp.float32)
    h1 = jnp.zeros((B, HID), jnp.float32)
    outs = []
    for t in range(T):
        xt = emb[:, t, :]
        h0 = jnp.tanh(xt @ params["wih0"] + h0 @ params["whh0"] + params["b0"])
        h1 = jnp.tanh(h0 @ params["wih1"] + h1 @ params["whh1"] + params["b1"])
        outs.append(h1 @ params["fc_w"] + params["fc_b"])
    y = jnp.stack(outs, axis=1)                         # (B, T, C)
    return y.reshape(-1, NCLASS)


if __name__ == "__main__":
    key = jax.random.PRNGKey(0)
    k_param, k_x = jax.random.split(key)
    params = init_params(k_param)
    slab = pack_params(params)

    B, T = 2, 8
    x = jax.random.randint(k_x, (B, T), 0, VOCAB, dtype=jnp.int32)

    out = jax.block_until_ready(forward(x, slab))
    ref = forward_ref(x, params)

    assert out.shape == (B * T, NCLASS)
    assert jnp.allclose(out, ref, rtol=1e-5, atol=1e-5), "mismatch vs reference"

    print("KERNEL_OK")
</pallas_src>

<mosaic_0001>
module attributes {stable_mosaic.version = 11 : i64} {
  func.func @rnn_kernel(%arg0: memref<16x1xi32, #tpu.memory_space<vmem>>, %arg1: memref<49x10xf32, #tpu.memory_space<vmem>>, %arg2: memref<16x4xf32, #tpu.memory_space<vmem>>, %arg3: memref<16x8xf32, #tpu.memory_space<vmem>>, %arg4: memref<16x8xf32, #tpu.memory_space<vmem>>) attributes {dimension_semantics = [], scalar_prefetch = 0 : i64, scratch_operands = 2 : i64, tpu.core_type = #tpu.core_type<tc>} {
    %c0 = arith.constant 0 : index
    %c0_0 = arith.constant 0 : index
    %0 = vector.load %arg1[%c0, %c0_0] : memref<49x10xf32, #tpu.memory_space<vmem>>, vector<49x10xf32>
    %1 = vector.extract_strided_slice %0 {offsets = [0, 0], sizes = [4, 10], strides = [1, 1]} : vector<49x10xf32> to vector<4x10xf32>
    %2 = vector.extract_strided_slice %0 {offsets = [4, 0], sizes = [10, 8], strides = [1, 1]} : vector<49x10xf32> to vector<10x8xf32>
    %3 = vector.extract_strided_slice %0 {offsets = [14, 0], sizes = [8, 8], strides = [1, 1]} : vector<49x10xf32> to vector<8x8xf32>
    %4 = vector.extract_strided_slice %0 {offsets = [22, 0], sizes = [1, 8], strides = [1, 1]} : vector<49x10xf32> to vector<1x8xf32>
    %5 = vector.extract_strided_slice %0 {offsets = [23, 0], sizes = [8, 8], strides = [1, 1]} : vector<49x10xf32> to vector<8x8xf32>
    %6 = vector.extract_strided_slice %0 {offsets = [31, 0], sizes = [8, 8], strides = [1, 1]} : vector<49x10xf32> to vector<8x8xf32>
    %7 = vector.extract_strided_slice %0 {offsets = [39, 0], sizes = [1, 8], strides = [1, 1]} : vector<49x10xf32> to vector<1x8xf32>
    %8 = vector.extract_strided_slice %0 {offsets = [40, 0], sizes = [8, 4], strides = [1, 1]} : vector<49x10xf32> to vector<8x4xf32>
    %9 = vector.extract_strided_slice %0 {offsets = [48, 0], sizes = [1, 4], strides = [1, 1]} : vector<49x10xf32> to vector<1x4xf32>
    %c0_1 = arith.constant 0 : index
    %c0_2 = arith.constant 0 : index
    %10 = vector.load %arg0[%c0_1, %c0_2] : memref<16x1xi32, #tpu.memory_space<vmem>>, vector<16x1xi32>
    %11 = tpu.iota {dimensions = array<i32: 1>} : vector<16x4xi32>
    %12 = vector.broadcast %10 : vector<16x1xi32> to vector<16x4xi32>
    %13 = arith.cmpi eq, %11, %12 : vector<16x4xi32>
    %14 = arith.extui %13 : vector<16x4xi1> to vector<16x4xi32>
    %15 = arith.sitofp %14 : vector<16x4xi32> to vector<16x4xf32>
    %cst = arith.constant dense<0.000000e+00> : vector<16x10xf32>
    %16 = tpu.matmul %15, %1, %cst {dimension_numbers = #tpu.dot_dimension_numbers<[1], [0], [0], [1], [0, 0, 1, 1], [], []>} : vector<16x4xf32>, vector<4x10xf32>, vector<16x10xf32> -> vector<16x10xf32>
    %cst_3 = arith.constant dense<0.000000e+00> : vector<16x8xf32>
    %17 = tpu.matmul %16, %2, %cst_3 {dimension_numbers = #tpu.dot_dimension_numbers<[1], [0], [0], [1], [0, 0, 1, 1], [], []>} : vector<16x10xf32>, vector<10x8xf32>, vector<16x8xf32> -> vector<16x8xf32>
    %18 = vector.broadcast %4 : vector<1x8xf32> to vector<16x8xf32>
    %19 = arith.addf %17, %18 : vector<16x8xf32>
    %cst_4 = arith.constant 0.000000e+00 : f32
    %20 = vector.broadcast %cst_4 : f32 to vector<2x8xf32>
    %21 = vector.extract_strided_slice %19 {offsets = [0, 0], sizes = [2, 8], strides = [1, 1]} : vector<16x8xf32> to vector<2x8xf32>
    %cst_5 = arith.constant dense<0.000000e+00> : vector<2x8xf32>
    %22 = tpu.matmul %20, %3, %cst_5 {dimension_numbers = #tpu.dot_dimension_numbers<[1], [0], [0], [1], [0, 0, 1, 1], [], []>} : vector<2x8xf32>, vector<8x8xf32>, vector<2x8xf32> -> vector<2x8xf32>
    %23 = arith.addf %21, %22 : vector<2x8xf32>
    %24 = math.tanh %23 : vector<2x8xf32>
    %c0_6 = arith.constant 0 : index
    %c0_7 = arith.constant 0 : index
    %25 = vector.load %arg3[%c0_6, %c0_7] : memref<16x8xf32, #tpu.memory_space<vmem>>, vector<2x8xf32>
    tpu.vector_store %arg3[%c0_6, %c0_7], %24 {strides = array<i32>} : memref<16x8xf32, #tpu.memory_space<vmem>>, vector<2x8xf32>,
    %26 = vector.extract_strided_slice %19 {offsets = [2, 0], sizes = [2, 8], strides = [1, 1]} : vector<16x8xf32> to vector<2x8xf32>
    %cst_8 = arith.constant dense<0.000000e+00> : vector<2x8xf32>
    %27 = tpu.matmul %24, %3, %cst_8 {dimension_numbers = #tpu.dot_dimension_numbers<[1], [0], [0], [1], [0, 0, 1, 1], [], []>} : vector<2x8xf32>, vector<8x8xf32>, vector<2x8xf32> -> vector<2x8xf32>
    %28 = arith.addf %26, %27 : vector<2x8xf32>
    %29 = math.tanh %28 : vector<2x8xf32>
    %c2 = arith.constant 2 : index
    %c0_9 = arith.constant 0 : index
    %30 = vector.load %arg3[%c2, %c0_9] : memref<16x8xf32, #tpu.memory_space<vmem>>, vector<2x8xf32>
    tpu.vector_store %arg3[%c2, %c0_9], %29 {strides = array<i32>} : memref<16x8xf32, #tpu.memory_space<vmem>>, vector<2x8xf32>,
    %31 = vector.extract_strided_slice %19 {offsets = [4, 0], sizes = [2, 8], strides = [1, 1]} : vector<16x8xf32> to vector<2x8xf32>
    %cst_10 = arith.constant dense<0.000000e+00> : vector<2x8xf32>
    %32 = tpu.matmul %29, %3, %cst_10 {dimension_numbers = #tpu.dot_dimension_numbers<[1], [0], [0], [1], [0, 0, 1, 1], [], []>} : vector<2x8xf32>, vector<8x8xf32>, vector<2x8xf32> -> vector<2x8xf32>
    %33 = arith.addf %31, %32 : vector<2x8xf32>
    %34 = math.tanh %33 : vector<2x8xf32>
    %c4 = arith.constant 4 : index
    %c0_11 = arith.constant 0 : index
    %35 = vector.load %arg3[%c4, %c0_11] : memref<16x8xf32, #tpu.memory_space<vmem>>, vector<2x8xf32>
    tpu.vector_store %arg3[%c4, %c0_11], %34 {strides = array<i32>} : memref<16x8xf32, #tpu.memory_space<vmem>>, vector<2x8xf32>,
    %36 = vector.extract_strided_slice %19 {offsets = [6, 0], sizes = [2, 8], strides = [1, 1]} : vector<16x8xf32> to vector<2x8xf32>
    %cst_12 = arith.constant dense<0.000000e+00> : vector<2x8xf32>
    %37 = tpu.matmul %34, %3, %cst_12 {dimension_numbers = #tpu.dot_dimension_numbers<[1], [0], [0], [1], [0, 0, 1, 1], [], []>} : vector<2x8xf32>, vector<8x8xf32>, vector<2x8xf32> -> vector<2x8xf32>
    %38 = arith.addf %36, %37 : vector<2x8xf32>
    %39 = math.tanh %38 : vector<2x8xf32>
    %c6 = arith.constant 6 : index
    %c0_13 = arith.constant 0 : index
    %40 = vector.load %arg3[%c6, %c0_13] : memref<16x8xf32, #tpu.memory_space<vmem>>, vector<2x8xf32>
    tpu.vector_store %arg3[%c6, %c0_13], %39 {strides = array<i32>} : memref<16x8xf32, #tpu.memory_space<vmem>>, vector<2x8xf32>,
    %41 = vector.extract_strided_slice %19 {offsets = [8, 0], sizes = [2, 8], strides = [1, 1]} : vector<16x8xf32> to vector<2x8xf32>
    %cst_14 = arith.constant dense<0.000000e+00> : vector<2x8xf32>
    %42 = tpu.matmul %39, %3, %cst_14 {dimension_numbers = #tpu.dot_dimension_numbers<[1], [0], [0], [1], [0, 0, 1, 1], [], []>} : vector<2x8xf32>, vector<8x8xf32>, vector<2x8xf32> -> vector<2x8xf32>
    %43 = arith.addf %41, %42 : vector<2x8xf32>
    %44 = math.tanh %43 : vector<2x8xf32>
    %c8 = arith.constant 8 : index
    %c0_15 = arith.constant 0 : index
    %45 = vector.load %arg3[%c8, %c0_15] : memref<16x8xf32, #tpu.memory_space<vmem>>, vector<2x8xf32>
    tpu.vector_store %arg3[%c8, %c0_15], %44 {strides = array<i32>} : memref<16x8xf32, #tpu.memory_space<vmem>>, vector<2x8xf32>,
    %46 = vector.extract_strided_slice %19 {offsets = [10, 0], sizes = [2, 8], strides = [1, 1]} : vector<16x8xf32> to vector<2x8xf32>
    %cst_16 = arith.constant dense<0.000000e+00> : vector<2x8xf32>
    %47 = tpu.matmul %44, %3, %cst_16 {dimension_numbers = #tpu.dot_dimension_numbers<[1], [0], [0], [1], [0, 0, 1, 1], [], []>} : vector<2x8xf32>, vector<8x8xf32>, vector<2x8xf32> -> vector<2x8xf32>
    %48 = arith.addf %46, %47 : vector<2x8xf32>
    %49 = math.tanh %48 : vector<2x8xf32>
    %c10 = arith.constant 10 : index
    %c0_17 = arith.constant 0 : index
    %50 = vector.load %arg3[%c10, %c0_17] : memref<16x8xf32, #tpu.memory_space<vmem>>, vector<2x8xf32>
    tpu.vector_store %arg3[%c10, %c0_17], %49 {strides = array<i32>} : memref<16x8xf32, #tpu.memory_space<vmem>>, vector<2x8xf32>,
    %51 = vector.extract_strided_slice %19 {offsets = [12, 0], sizes = [2, 8], strides = [1, 1]} : vector<16x8xf32> to vector<2x8xf32>
    %cst_18 = arith.constant dense<0.000000e+00> : vector<2x8xf32>
    %52 = tpu.matmul %49, %3, %cst_18 {dimension_numbers = #tpu.dot_dimension_numbers<[1], [0], [0], [1], [0, 0, 1, 1], [], []>} : vector<2x8xf32>, vector<8x8xf32>, vector<2x8xf32> -> vector<2x8xf32>
    %53 = arith.addf %51, %52 : vector<2x8xf32>
    %54 = math.tanh %53 : vector<2x8xf32>
    %c12 = arith.constant 12 : index
    %c0_19 = arith.constant 0 : index
    %55 = vector.load %arg3[%c12, %c0_19] : memref<16x8xf32, #tpu.memory_space<vmem>>, vector<2x8xf32>
    tpu.vector_store %arg3[%c12, %c0_19], %54 {strides = array<i32>} : memref<16x8xf32, #tpu.memory_space<vmem>>, vector<2x8xf32>,
    %56 = vector.extract_strided_slice %19 {offsets = [14, 0], sizes = [2, 8], strides = [1, 1]} : vector<16x8xf32> to vector<2x8xf32>
    %cst_20 = arith.constant dense<0.000000e+00> : vector<2x8xf32>
    %57 = tpu.matmul %54, %3, %cst_20 {dimension_numbers = #tpu.dot_dimension_numbers<[1], [0], [0], [1], [0, 0, 1, 1], [], []>} : vector<2x8xf32>, vector<8x8xf32>, vector<2x8xf32> -> vector<2x8xf32>
    %58 = arith.addf %56, %57 : vector<2x8xf32>
    %59 = math.tanh %58 : vector<2x8xf32>
    %c14 = arith.constant 14 : index
    %c0_21 = arith.constant 0 : index
    %60 = vector.load %arg3[%c14, %c0_21] : memref<16x8xf32, #tpu.memory_space<vmem>>, vector<2x8xf32>
    tpu.vector_store %arg3[%c14, %c0_21], %59 {strides = array<i32>} : memref<16x8xf32, #tpu.memory_space<vmem>>, vector<2x8xf32>,
    %c0_22 = arith.constant 0 : index
    %c0_23 = arith.constant 0 : index
    %61 = vector.load %arg3[%c0_22, %c0_23] : memref<16x8xf32, #tpu.memory_space<vmem>>, vector<16x8xf32>
    %cst_24 = arith.constant dense<0.000000e+00> : vector<16x8xf32>
    %62 = tpu.matmul %61, %5, %cst_24 {dimension_numbers = #tpu.dot_dimension_numbers<[1], [0], [0], [1], [0, 0, 1, 1], [], []>} : vector<16x8xf32>, vector<8x8xf32>, vector<16x8xf32> -> vector<16x8xf32>
    %63 = vector.broadcast %7 : vector<1x8xf32> to vector<16x8xf32>
    %64 = arith.addf %62, %63 : vector<16x8xf32>
    %cst_25 = arith.constant 0.000000e+00 : f32
    %65 = vector.broadcast %cst_25 : f32 to vector<2x8xf32>
    %66 = vector.extract_strided_slice %64 {offsets = [0, 0], sizes = [2, 8], strides = [1, 1]} : vector<16x8xf32> to vector<2x8xf32>
    %cst_26 = arith.constant dense<0.000000e+00> : vector<2x8xf32>
    %67 = tpu.matmul %65, %6, %cst_26 {dimension_numbers = #tpu.dot_dimension_numbers<[1], [0], [0], [1], [0, 0, 1, 1], [], []>} : vector<2x8xf32>, vector<8x8xf32>, vector<2x8xf32> -> vector<2x8xf32>
    %68 = arith.addf %66, %67 : vector<2x8xf32>
    %69 = math.tanh %68 : vector<2x8xf32>
    %c0_27 = arith.constant 0 : index
    %c0_28 = arith.constant 0 : index
    %70 = vector.load %arg4[%c0_27, %c0_28] : memref<16x8xf32, #tpu.memory_space<vmem>>, vector<2x8xf32>
    tpu.vector_store %arg4[%c0_27, %c0_28], %69 {strides = array<i32>} : memref<16x8xf32, #tpu.memory_space<vmem>>, vector<2x8xf32>,
    %71 = vector.extract_strided_slice %64 {offsets = [2, 0], sizes = [2, 8], strides = [1, 1]} : vector<16x8xf32> to vector<2x8xf32>
    %cst_29 = arith.constant dense<0.000000e+00> : vector<2x8xf32>
    %72 = tpu.matmul %69, %6, %cst_29 {dimension_numbers = #tpu.dot_dimension_numbers<[1], [0], [0], [1], [0, 0, 1, 1], [], []>} : vector<2x8xf32>, vector<8x8xf32>, vector<2x8xf32> -> vector<2x8xf32>
    %73 = arith.addf %71, %72 : vector<2x8xf32>
    %74 = math.tanh %73 : vector<2x8xf32>
    %c2_30 = arith.constant 2 : index
    %c0_31 = arith.constant 0 : index
    %75 = vector.load %arg4[%c2_30, %c0_31] : memref<16x8xf32, #tpu.memory_space<vmem>>, vector<2x8xf32>
    tpu.vector_store %arg4[%c2_30, %c0_31], %74 {strides = array<i32>} : memref<16x8xf32, #tpu.memory_space<vmem>>, vector<2x8xf32>,
    %76 = vector.extract_strided_slice %64 {offsets = [4, 0], sizes = [2, 8], strides = [1, 1]} : vector<16x8xf32> to vector<2x8xf32>
    %cst_32 = arith.constant dense<0.000000e+00> : vector<2x8xf32>
    %77 = tpu.matmul %74, %6, %cst_32 {dimension_numbers = #tpu.dot_dimension_numbers<[1], [0], [0], [1], [0, 0, 1, 1], [], []>} : vector<2x8xf32>, vector<8x8xf32>, vector<2x8xf32> -> vector<2x8xf32>
    %78 = arith.addf %76, %77 : vector<2x8xf32>
    %79 = math.tanh %78 : vector<2x8xf32>
    %c4_33 = arith.constant 4 : index
    %c0_34 = arith.constant 0 : index
    %80 = vector.load %arg4[%c4_33, %c0_34] : memref<16x8xf32, #tpu.memory_space<vmem>>, vector<2x8xf32>
    tpu.vector_store %arg4[%c4_33, %c0_34], %79 {strides = array<i32>} : memref<16x8xf32, #tpu.memory_space<vmem>>, vector<2x8xf32>,
    %81 = vector.extract_strided_slice %64 {offsets = [6, 0], sizes = [2, 8], strides = [1, 1]} : vector<16x8xf32> to vector<2x8xf32>
    %cst_35 = arith.constant dense<0.000000e+00> : vector<2x8xf32>
    %82 = tpu.matmul %79, %6, %cst_35 {dimension_numbers = #tpu.dot_dimension_numbers<[1], [0], [0], [1], [0, 0, 1, 1], [], []>} : vector<2x8xf32>, vector<8x8xf32>, vector<2x8xf32> -> vector<2x8xf32>
    %83 = arith.addf %81, %82 : vector<2x8xf32>
    %84 = math.tanh %83 : vector<2x8xf32>
    %c6_36 = arith.constant 6 : index
    %c0_37 = arith.constant 0 : index
    %85 = vector.load %arg4[%c6_36, %c0_37] : memref<16x8xf32, #tpu.memory_space<vmem>>, vector<2x8xf32>
    tpu.vector_store %arg4[%c6_36, %c0_37], %84 {strides = array<i32>} : memref<16x8xf32, #tpu.memory_space<vmem>>, vector<2x8xf32>,
    %86 = vector.extract_strided_slice %64 {offsets = [8, 0], sizes = [2, 8], strides = [1, 1]} : vector<16x8xf32> to vector<2x8xf32>
    %cst_38 = arith.constant dense<0.000000e+00> : vector<2x8xf32>
    %87 = tpu.matmul %84, %6, %cst_38 {dimension_numbers = #tpu.dot_dimension_numbers<[1], [0], [0], [1], [0, 0, 1, 1], [], []>} : vector<2x8xf32>, vector<8x8xf32>, vector<2x8xf32> -> vector<2x8xf32>
    %88 = arith.addf %86, %87 : vector<2x8xf32>
    %89 = math.tanh %88 : vector<2x8xf32>
    %c8_39 = arith.constant 8 : index
    %c0_40 = arith.constant 0 : index
    %90 = vector.load %arg4[%c8_39, %c0_40] : memref<16x8xf32, #tpu.memory_space<vmem>>, vector<2x8xf32>
    tpu.vector_store %arg4[%c8_39, %c0_40], %89 {strides = array<i32>} : memref<16x8xf32, #tpu.memory_space<vmem>>, vector<2x8xf32>,
    %91 = vector.extract_strided_slice %64 {offsets = [10, 0], sizes = [2, 8], strides = [1, 1]} : vector<16x8xf32> to vector<2x8xf32>
    %cst_41 = arith.constant dense<0.000000e+00> : vector<2x8xf32>
    %92 = tpu.matmul %89, %6, %cst_41 {dimension_numbers = #tpu.dot_dimension_numbers<[1], [0], [0], [1], [0, 0, 1, 1], [], []>} : vector<2x8xf32>, vector<8x8xf32>, vector<2x8xf32> -> vector<2x8xf32>
    %93 = arith.addf %91, %92 : vector<2x8xf32>
    %94 = math.tanh %93 : vector<2x8xf32>
    %c10_42 = arith.constant 10 : index
    %c0_43 = arith.constant 0 : index
    %95 = vector.load %arg4[%c10_42, %c0_43] : memref<16x8xf32, #tpu.memory_space<vmem>>, vector<2x8xf32>
    tpu.vector_store %arg4[%c10_42, %c0_43], %94 {strides = array<i32>} : memref<16x8xf32, #tpu.memory_space<vmem>>, vector<2x8xf32>,
    %96 = vector.extract_strided_slice %64 {offsets = [12, 0], sizes = [2, 8], strides = [1, 1]} : vector<16x8xf32> to vector<2x8xf32>
    %cst_44 = arith.constant dense<0.000000e+00> : vector<2x8xf32>
    %97 = tpu.matmul %94, %6, %cst_44 {dimension_numbers = #tpu.dot_dimension_numbers<[1], [0], [0], [1], [0, 0, 1, 1], [], []>} : vector<2x8xf32>, vector<8x8xf32>, vector<2x8xf32> -> vector<2x8xf32>
    %98 = arith.addf %96, %97 : vector<2x8xf32>
    %99 = math.tanh %98 : vector<2x8xf32>
    %c12_45 = arith.constant 12 : index
    %c0_46 = arith.constant 0 : index
    %100 = vector.load %arg4[%c12_45, %c0_46] : memref<16x8xf32, #tpu.memory_space<vmem>>, vector<2x8xf32>
    tpu.vector_store %arg4[%c12_45, %c0_46], %99 {strides = array<i32>} : memref<16x8xf32, #tpu.memory_space<vmem>>, vector<2x8xf32>,
    %101 = vector.extract_strided_slice %64 {offsets = [14, 0], sizes = [2, 8], strides = [1, 1]} : vector<16x8xf32> to vector<2x8xf32>
    %cst_47 = arith.constant dense<0.000000e+00> : vector<2x8xf32>
    %102 = tpu.matmul %99, %6, %cst_47 {dimension_numbers = #tpu.dot_dimension_numbers<[1], [0], [0], [1], [0, 0, 1, 1], [], []>} : vector<2x8xf32>, vector<8x8xf32>, vector<2x8xf32> -> vector<2x8xf32>
    %103 = arith.addf %101, %102 : vector<2x8xf32>
    %104 = math.tanh %103 : vector<2x8xf32>
    %c14_48 = arith.constant 14 : index
    %c0_49 = arith.constant 0 : index
    %105 = vector.load %arg4[%c14_48, %c0_49] : memref<16x8xf32, #tpu.memory_space<vmem>>, vector<2x8xf32>
    tpu.vector_store %arg4[%c14_48, %c0_49], %104 {strides = array<i32>} : memref<16x8xf32, #tpu.memory_space<vmem>>, vector<2x8xf32>,
    %c0_50 = arith.constant 0 : index
    %c0_51 = arith.constant 0 : index
    %106 = vector.load %arg4[%c0_50, %c0_51] : memref<16x8xf32, #tpu.memory_space<vmem>>, vector<16x8xf32>
    %cst_52 = arith.constant dense<0.000000e+00> : vector<16x4xf32>
    %107 = tpu.matmul %106, %8, %cst_52 {dimension_numbers = #tpu.dot_dimension_numbers<[1], [0], [0], [1], [0, 0, 1, 1], [], []>} : vector<16x8xf32>, vector<8x4xf32>, vector<16x4xf32> -> vector<16x4xf32>
    %108 = vector.broadcast %9 : vector<1x4xf32> to vector<16x4xf32>
    %109 = arith.addf %107, %108 : vector<16x4xf32>
    %c0_53 = arith.constant 0 : index
    %c0_54 = arith.constant 0 : index
    %110 = vector.load %arg2[%c0_53, %c0_54] : memref<16x4xf32, #tpu.memory_space<vmem>>, vector<16x4xf32>
    tpu.vector_store %arg2[%c0_53, %c0_54], %109 {strides = array<i32>} : memref<16x4xf32, #tpu.memory_space<vmem>>, vector<16x4xf32>,
    return
  }
}

</mosaic_0001>

<llo_original>
// kernel: tpu_custom_call.1
$region0: #{tpu_custom_call.1}
  #allocation0 [shape = 'u32[]', space=smem, size = 0x4, offset = 0x4, fixed_abs, tag = 'smem constant byte address 0x4 - core index']
  #allocation1 [shape = 'u32[144,128]{1,0:T(1,128)}', space=vmem, size = 0x12000, scoped, tag = 'internal scratch']
  #allocation2 [shape = 'f32[16,8]{1,0:T(8,128)}', space=vmem, size = 0x2000, scoped, tag = 'scratch operand']
  #allocation3 [shape = 'f32[16,8]{1,0:T(8,128)}', space=vmem, size = 0x2000, scoped, tag = 'scratch operand']
  %s0 = inlined_call_operand.vmem [shape: s32[16,1], index: 0, kind: input, shape index: {}]
  %s1 = inlined_call_operand.vmem [shape: f32[49,10], index: 1, kind: input, shape index: {}]
  %s2 = inlined_call_operand.vmem [shape: f32[16,4], index: 2, kind: output, shape index: {}]
  %s3 = sld [smem:[#allocation0]]
  $region18: #{tpu_custom_call.1} parent=0
    _
  %s5 = ssub.s32 1, %s3
  %s6 = scalar_select 0, %s5, %s3
  // Predicated region
  $region2: #{tpu_custom_call.1} parent=0 // pred_check
    _
  $region3: #{tpu_custom_call.1} parent=0 // pred_check_branch
    %8 = sbr.rel (0) target = $region5
  $region4: #{tpu_custom_call.1} parent=0 // pred_region
    _
  $region5: #{tpu_custom_call.1} parent=0 // pred_fallthru
    _
  // Predicated region
  $region6: #{tpu_custom_call.1} parent=0 // pred_check
    _
  $region7: #{tpu_custom_call.1} parent=0 // pred_check_branch
    %10 = sbr.rel (0) target = $region9
  $region8: #{tpu_custom_call.1} parent=0 // pred_region
    _
  $region9: #{tpu_custom_call.1} parent=0 // pred_fallthru
    _
  %v11 = vld [vmem:[%s1] sm:$0xff]
  %v12 = vld [vmem:[%s1 + $0x8] sm:$0xff]
  %v13 = vld [vmem:[%s1 + $0x10] sm:$0xff]
  %v14 = vld [vmem:[%s1 + $0x18] sm:$0xff]
  %v15 = vld [vmem:[%s1 + $0x20] sm:$0xff]
  %v16 = vld [vmem:[%s1 + $0x28] sm:$0xff]
  %v17 = vld [vmem:[%s1 + $0x30] sm:$0x1]
  %v18 = vld [vmem:[%s0] sm:$0xff]
  %v19 = vld [vmem:[%s0 + $0x8] sm:$0xff]
  %v20 = vlaneseq
  %v21 = vand.u32 %v20, 127
  %22 = vset.pattern.permute.xlu0 0
  %23 = vperm.xlu0 %22, %v18
  %v24 = vpop.permute.xlu0 %23
  %25 = vset.pattern.permute.xlu0 0
  %26 = vperm.xlu0 %25, %v19
  %v27 = vpop.permute.xlu0 %26
  %vm28 = vcmp.eq.s32.totalorder %v21, %v24
  %vm29 = vcmp.eq.s32.totalorder %v21, %v27
  %v30 = vsel %vm28, 1, 0
  %v31 = vsel %vm29, 1, 0
  %v32 = vcvt.s32.f32 %v30
  %v33 = vcvt.s32.f32 %v31
  %vm34 = vcmask 31744
  %v36 = vsel %vm34, %v32, 0
  %v39 = vsel %vm34, %v33, 0
  %vm41 = vcmask 1043456
  %v43 = vsel %vm41, %v11, 0
  %45 = vmatprep.subr.mxu0 0.0
  %46 = vmatpush1.msra.mxu0 %v43
  %47 = vmatprep.subr.mxu0 0.0
  %48 = vmatpush1.msra.mxu0 0.0
  %49 = vmatprep.subr.mxu0 0.0
  %50 = vmatpush1.msra.mxu0 0.0
  %51 = vmatprep.subr.mxu0 0.0
  %52 = vmatpush1.msra.mxu0 0.0
  %53 = vmatprep.subr.mxu0 0.0
  %54 = vmatpush1.msra.mxu0 0.0
  %55 = vmatprep.subr.mxu0 0.0
  %56 = vmatpush1.msra.mxu0 0.0
  %57 = vmatprep.subr.mxu0 0.0
  %58 = vmatpush1.msra.mxu0 0.0
  %59 = vmatprep.subr.mxu0 0.0
  %60 = vmatpush1.msra.mxu0 0.0
  %61 = vmatprep.subr.mxu0 0.0
  %62 = vmatpush1.msra.mxu0 0.0
  %63 = vmatprep.subr.mxu0 0.0
  %64 = vmatpush1.msra.mxu0 0.0
  %65 = vmatprep.subr.mxu0 0.0
  %66 = vmatpush1.msra.mxu0 0.0
  %67 = vmatprep.subr.mxu0 0.0
  %68 = vmatpush1.msra.mxu0 0.0
  %69 = vmatprep.subr.mxu0 0.0
  %70 = vmatpush1.msra.mxu0 0.0
  %71 = vmatprep.subr.mxu0 0.0
  %72 = vmatpush1.msra.mxu0 0.0
  %73 = vmatprep.subr.mxu0 0.0
  %74 = vmatpush1.msra.mxu0 0.0
  %75 = vmatprep.subr.mxu0 0.0
  %76 = vmatpush1.msra.mxu0 0.0
  %77 = vmatprep.subr.mxu0 0.0
  %78 = vmatpush1.msra.mxu0 0.0
  %79 = vmatprep.subr.mxu0 0.0
  %80 = vmatpush1.msra.mxu0 0.0
  %81 = vmatprep.subr.mxu0 0.0
  %82 = vmatpush1.msra.mxu0 0.0
  %83 = vmatprep.subr.mxu0 0.0
  %84 = vmatpush1.msra.mxu0 0.0
  %85 = vmatprep.subr.mxu0 0.0
  %86 = vmatpush1.msra.mxu0 0.0
  %87 = vmatprep.subr.mxu0 0.0
  %88 = vmatpush1.msra.mxu0 0.0
  %89 = vmatprep.subr.mxu0 0.0
  %90 = vmatpush1.msra.mxu0 0.0
  %91 = vmatprep.subr.mxu0 0.0
  %92 = vmatpush1.msra.mxu0 0.0
  %93 = vmatprep.subr.mxu0 0.0
  %94 = vmatpush1.msra.mxu0 0.0
  %95 = vmatprep.subr.mxu0 0.0
  %96 = vmatpush1.msra.mxu0 0.0
  %97 = vmatprep.subr.mxu0 0.0
  %98 = vmatpush1.msra.mxu0 0.0
  %99 = vmatprep.subr.mxu0 0.0
  %100 = vmatpush1.msra.mxu0 0.0
  %101 = vmatprep.subr.mxu0 0.0
  %102 = vmatpush1.msra.mxu0 0.0
  %103 = vmatprep.subr.mxu0 0.0
  %104 = vmatpush1.msra.mxu0 0.0
  %105 = vmatprep.subr.mxu0 0.0
  %106 = vmatpush1.msra.mxu0 0.0
  %107 = vmatprep.subr.mxu0 0.0
  %108 = vmatpush1.msra.mxu0 0.0
  %109 = vmatprep.mubr.f32.mxu0 0.0
  %110 = vmatmul.mubr.f32.gmra.mrb[0].mxu0 %v36
  %v111 = vpop.f32.mrb[0].mxu0
  %v112 = vadd.f32 0.0, %v111
  %v113 = vpop.f32.mrb[0].mxu0
  %114 = vmatprep.mubr.f32.mxu0 0.0
  %115 = vmatmul.mubr.f32.gmra.mrb[0].mxu0 %v39
  %v116 = vpop.f32.mrb[0].mxu0
  %v117 = vadd.f32 0.0, %v116
  %v118 = vpop.f32.mrb[0].mxu0
  %119 = vdwg.mxu0
  %v120 = vlaneseq
  %v121 = vshrl.u32 %v120, 7
  %v122 = vsub.s32 6, %v121
  %v123 = vrot.slane %v13, %v122
  %v125 = vrot.slane %v11, 4
  %v126 = vrot.slane %v12, 4
  %v127 = vsel %vm41, %v125, %v126
  %vm129 = vcmask 80896
  %v131 = vsel %vm129, %v112, 0
  %v134 = vsel %vm129, %v117, 0
  %vm136 = vcmask 1041408
  %v137 = vsel %vm136, %v126, 0
  %139 = vmatprep.subr.mxu0 0.0
  %140 = vmatpush1.msra.mxu0 %v127
  %141 = vmatprep.subr.mxu0 0.0
  %142 = vmatpush1.msra.mxu0 %v137
  %143 = vmatprep.subr.mxu0 0.0
  %144 = vmatpush1.msra.mxu0 0.0
  %145 = vmatprep.subr.mxu0 0.0
  %146 = vmatpush1.msra.mxu0 0.0
  %147 = vmatprep.subr.mxu0 0.0
  %148 = vmatpush1.msra.mxu0 0.0
  %149 = vmatprep.subr.mxu0 0.0
  %150 = vmatpush1.msra.mxu0 0.0
  %151 = vmatprep.subr.mxu0 0.0
  %152 = vmatpush1.msra.mxu0 0.0
  %153 = vmatprep.subr.mxu0 0.0
  %154 = vmatpush1.msra.mxu0 0.0
  %155 = vmatprep.subr.mxu0 0.0
  %156 = vmatpush1.msra.mxu0 0.0
  %157 = vmatprep.subr.mxu0 0.0
  %158 = vmatpush1.msra.mxu0 0.0
  %159 = vmatprep.subr.mxu0 0.0
  %160 = vmatpush1.msra.mxu0 0.0
  %161 = vmatprep.subr.mxu0 0.0
  %162 = vmatpush1.msra.mxu0 0.0
  %163 = vmatprep.subr.mxu0 0.0
  %164 = vmatpush1.msra.mxu0 0.0
  %165 = vmatprep.subr.mxu0 0.0
  %166 = vmatpush1.msra.mxu0 0.0
  %167 = vmatprep.subr.mxu0 0.0
  %168 = vmatpush1.msra.mxu0 0.0
  %169 = vmatprep.subr.mxu0 0.0
  %170 = vmatpush1.msra.mxu0 0.0
  %171 = vmatprep.subr.mxu0 0.0
  %172 = vmatpush1.msra.mxu0 0.0
  %173 = vmatprep.subr.mxu0 0.0
  %174 = vmatpush1.msra.mxu0 0.0
  %175 = vmatprep.subr.mxu0 0.0
  %176 = vmatpush1.msra.mxu0 0.0
  %177 = vmatprep.subr.mxu0 0.0
  %178 = vmatpush1.msra.mxu0 0.0
  %179 = vmatprep.subr.mxu0 0.0
  %180 = vmatpush1.msra.mxu0 0.0
  %181 = vmatprep.subr.mxu0 0.0
  %182 = vmatpush1.msra.mxu0 0.0
  %183 = vmatprep.subr.mxu0 0.0
  %184 = vmatpush1.msra.mxu0 0.0
  %185 = vmatprep.subr.mxu0 0.0
  %186 = vmatpush1.msra.mxu0 0.0
  %187 = vmatprep.subr.mxu0 0.0
  %188 = vmatpush1.msra.mxu0 0.0
  %189 = vmatprep.subr.mxu0 0.0
  %190 = vmatpush1.msra.mxu0 0.0
  %191 = vmatprep.subr.mxu0 0.0
  %192 = vmatpush1.msra.mxu0 0.0
  %193 = vmatprep.subr.mxu0 0.0
  %194 = vmatpush1.msra.mxu0 0.0
  %195 = vmatprep.subr.mxu0 0.0
  %196 = vmatpush1.msra.mxu0 0.0
  %197 = vmatprep.subr.mxu0 0.0
  %198 = vmatpush1.msra.mxu0 0.0
  %199 = vmatprep.subr.mxu0 0.0
  %200 = vmatpush1.msra.mxu0 0.0
  %201 = vmatprep.subr.mxu0 0.0
  %202 = vmatpush1.msra.mxu0 0.0
  %203 = vmatprep.mubr.f32.mxu0 0.0
  %204 = vmatmul.mubr.f32.gmra.mrb[0].mxu0 %v131
  %v205 = vpop.f32.mrb[0].mxu0
  %v206 = vadd.f32 %v123, %v205
  %v207 = vpop.f32.mrb[0].mxu0
  %208 = vmatprep.mubr.f32.mxu0 0.0
  %209 = vmatmul.mubr.f32.gmra.mrb[0].mxu0 %v134
  %v210 = vpop.f32.mrb[0].mxu0
  %v211 = vadd.f32 %v123, %v210
  %v212 = vpop.f32.mrb[0].mxu0
  %213 = vdwg.mxu0
  %v215 = vrot.slane %v12, 6
  %v216 = vrot.slane %v13, 6
  %v217 = vsel %vm136, %v215, %v216
  %vm219 = vcmask 64512
  %v221 = vsel %vm219, 0.0, 0
  %223 = vmatprep.subr.mxu0 0.0
  %224 = vmatpush1.msra.mxu0 %v217
  %225 = vmatprep.subr.mxu0 0.0
  %226 = vmatpush1.msra.mxu0 0.0
  %227 = vmatprep.subr.mxu0 0.0
  %228 = vmatpush1.msra.mxu0 0.0
  %229 = vmatprep.subr.mxu0 0.0
  %230 = vmatpush1.msra.mxu0 0.0
  %231 = vmatprep.subr.mxu0 0.0
  %232 = vmatpush1.msra.mxu0 0.0
  %233 = vmatprep.subr.mxu0 0.0
  %234 = vmatpush1.msra.mxu0 0.0
  %235 = vmatprep.subr.mxu0 0.0
  %236 = vmatpush1.msra.mxu0 0.0
  %237 = vmatprep.subr.mxu0 0.0
  %238 = vmatpush1.msra.mxu0 0.0
  %239 = vmatprep.subr.mxu0 0.0
  %240 = vmatpush1.msra.mxu0 0.0
  %241 = vmatprep.subr.mxu0 0.0
  %242 = vmatpush1.msra.mxu0 0.0
  %243 = vmatprep.subr.mxu0 0.0
  %244 = vmatpush1.msra.mxu0 0.0
  %245 = vmatprep.subr.mxu0 0.0
  %246 = vmatpush1.msra.mxu0 0.0
  %247 = vmatprep.subr.mxu0 0.0
  %248 = vmatpush1.msra.mxu0 0.0
  %249 = vmatprep.subr.mxu0 0.0
  %250 = vmatpush1.msra.mxu0 0.0
  %251 = vmatprep.subr.mxu0 0.0
  %252 = vmatpush1.msra.mxu0 0.0
  %253 = vmatprep.subr.mxu0 0.0
  %254 = vmatpush1.msra.mxu0 0.0
  %255 = vmatprep.subr.mxu0 0.0
  %256 = vmatpush1.msra.mxu0 0.0
  %257 = vmatprep.subr.mxu0 0.0
  %258 = vmatpush1.msra.mxu0 0.0
  %259 = vmatprep.subr.mxu0 0.0
  %260 = vmatpush1.msra.mxu0 0.0
  %261 = vmatprep.subr.mxu0 0.0
  %262 = vmatpush1.msra.mxu0 0.0
  %263 = vmatprep.subr.mxu0 0.0
  %264 = vmatpush1.msra.mxu0 0.0
  %265 = vmatprep.subr.mxu0 0.0
  %266 = vmatpush1.msra.mxu0 0.0
  %267 = vmatprep.subr.mxu0 0.0
  %268 = vmatpush1.msra.mxu0 0.0
  %269 = vmatprep.subr.mxu0 0.0
  %270 = vmatpush1.msra.mxu0 0.0
  %271 = vmatprep.subr.mxu0 0.0
  %272 = vmatpush1.msra.mxu0 0.0
  %273 = vmatprep.subr.mxu0 0.0
  %274 = vmatpush1.msra.mxu0 0.0
  %275 = vmatprep.subr.mxu0 0.0
  %276 = vmatpush1.msra.mxu0 0.0
  %277 = vmatprep.subr.mxu0 0.0
  %278 = vmatpush1.msra.mxu0 0.0
  %279 = vmatprep.subr.mxu0 0.0
  %280 = vmatpush1.msra.mxu0 0.0
  %281 = vmatprep.subr.mxu0 0.0
  %282 = vmatpush1.msra.mxu0 0.0
  %283 = vmatprep.subr.mxu0 0.0
  %284 = vmatpush1.msra.mxu0 0.0
  %285 = vmatprep.subr.mxu0 0.0
  %286 = vmatpush1.msra.mxu0 0.0
  %287 = vmatprep.mubr.f32.mxu0 0.0
  %288 = vmatmul.mubr.f32.gmra.mrb[0].mxu0 %v221
  %v289 = vpop.f32.mrb[0].mxu0
  %v290 = vadd.f32 0.0, %v289
  %v291 = vpop.f32.mrb[0].mxu0
  %292 = vdwg.mxu0
  %v293 = vadd.f32 %v206, %v290
  %v294 = vtanh.pop %v293
  %vm295 = vcmask 58368
  %296 = vst.msk [vmem:[#allocation2] sm:$0x3] %vm295, %v294
  %v298 = vsel %vm219, %v294, 0
  %300 = vmatprep.subr.mxu0 0.0
  %301 = vmatpush1.msra.mxu0 %v217
  %302 = vmatprep.subr.mxu0 0.0
  %303 = vmatpush1.msra.mxu0 0.0
  %304 = vmatprep.subr.mxu0 0.0
  %305 = vmatpush1.msra.mxu0 0.0
  %306 = vmatprep.subr.mxu0 0.0
  %307 = vmatpush1.msra.mxu0 0.0
  %308 = vmatprep.subr.mxu0 0.0
  %309 = vmatpush1.msra.mxu0 0.0
  %310 = vmatprep.subr.mxu0 0.0
  %311 = vmatpush1.msra.mxu0 0.0
  %312 = vmatprep.subr.mxu0 0.0
  %313 = vmatpush1.msra.mxu0 0.0
  %314 = vmatprep.subr.mxu0 0.0
  %315 = vmatpush1.msra.mxu0 0.0
  %316 = vmatprep.subr.mxu0 0.0
  %317 = vmatpush1.msra.mxu0 0.0
  %318 = vmatprep.subr.mxu0 0.0
  %319 = vmatpush1.msra.mxu0 0.0
  %320 = vmatprep.subr.mxu0 0.0
  %321 = vmatpush1.msra.mxu0 0.0
  %322 = vmatprep.subr.mxu0 0.0
  %323 = vmatpush1.msra.mxu0 0.0
  %324 = vmatprep.subr.mxu0 0.0
  %325 = vmatpush1.msra.mxu0 0.0
  %326 = vmatprep.subr.mxu0 0.0
  %327 = vmatpush1.msra.mxu0 0.0
  %328 = vmatprep.subr.mxu0 0.0
  %329 = vmatpush1.msra.mxu0 0.0
  %330 = vmatprep.subr.mxu0 0.0
  %331 = vmatpush1.msra.mxu0 0.0
  %332 = vmatprep.subr.mxu0 0.0
  %333 = vmatpush1.msra.mxu0 0.0
  %334 = vmatprep.subr.mxu0 0.0
  %335 = vmatpush1.msra.mxu0 0.0
  %336 = vmatprep.subr.mxu0 0.0
  %337 = vmatpush1.msra.mxu0 0.0
  %338 = vmatprep.subr.mxu0 0.0
  %339 = vmatpush1.msra.mxu0 0.0
  %340 = vmatprep.subr.mxu0 0.0
  %341 = vmatpush1.msra.mxu0 0.0
  %342 = vmatprep.subr.mxu0 0.0
  %343 = vmatpush1.msra.mxu0 0.0
  %344 = vmatprep.subr.mxu0 0.0
  %345 = vmatpush1.msra.mxu0 0.0
  %346 = vmatprep.subr.mxu0 0.0
  %347 = vmatpush1.msra.mxu0 0.0
  %348 = vmatprep.subr.mxu0 0.0
  %349 = vmatpush1.msra.mxu0 0.0
  %350 = vmatprep.subr.mxu0 0.0
  %351 = vmatpush1.msra.mxu0 0.0
  %352 = vmatprep.subr.mxu0 0.0
  %353 = vmatpush1.msra.mxu0 0.0
  %354 = vmatprep.subr.mxu0 0.0
  %355 = vmatpush1.msra.mxu0 0.0
  %356 = vmatprep.subr.mxu0 0.0
  %357 = vmatpush1.msra.mxu0 0.0
  %358 = vmatprep.subr.mxu0 0.0
  %359 = vmatpush1.msra.mxu0 0.0
  %360 = vmatprep.subr.mxu0 0.0
  %361 = vmatpush1.msra.mxu0 0.0
  %362 = vmatprep.subr.mxu0 0.0
  %363 = vmatpush1.msra.mxu0 0.0
  %364 = vmatprep.mubr.f32.mxu0 0.0
  %365 = vmatmul.mubr.f32.gmra.mrb[0].mxu0 %v298
  %v366 = vpop.f32.mrb[0].mxu0
  %v367 = vadd.f32 0.0, %v366
  %v368 = vpop.f32.mrb[0].mxu0
  %369 = vdwg.mxu0
  %v371 = vrot.slane %v367, 6
  %v373 = vadd.f32 %v206, %v371
  %v374 = vtanh.pop %v373
  %vm375 = vcmask 60418
  %376 = vst.msk [vmem:[#allocation2] sm:$0xc] %vm375, %v374
  %v378 = vrot.slane %v374, 2
  %v379 = vsel %vm219, %v378, 0
  %381 = vmatprep.subr.mxu0 0.0
  %382 = vmatpush1.msra.mxu0 %v217
  %383 = vmatprep.subr.mxu0 0.0
  %384 = vmatpush1.msra.mxu0 0.0
  %385 = vmatprep.subr.mxu0 0.0
  %386 = vmatpush1.msra.mxu0 0.0
  %387 = vmatprep.subr.mxu0 0.0
  %388 = vmatpush1.msra.mxu0 0.0
  %389 = vmatprep.subr.mxu0 0.0
  %390 = vmatpush1.msra.mxu0 0.0
  %391 = vmatprep.subr.mxu0 0.0
  %392 = vmatpush1.msra.mxu0 0.0
  %393 = vmatprep.subr.mxu0 0.0
  %394 = vmatpush1.msra.mxu0 0.0
  %395 = vmatprep.subr.mxu0 0.0
  %396 = vmatpush1.msra.mxu0 0.0
  %397 = vmatprep.subr.mxu0 0.0
  %398 = vmatpush1.msra.mxu0 0.0
  %399 = vmatprep.subr.mxu0 0.0
  %400 = vmatpush1.msra.mxu0 0.0
  %401 = vmatprep.subr.mxu0 0.0
  %402 = vmatpush1.msra.mxu0 0.0
  %403 = vmatprep.subr.mxu0 0.0
  %404 = vmatpush1.msra.mxu0 0.0
  %405 = vmatprep.subr.mxu0 0.0
  %406 = vmatpush1.msra.mxu0 0.0
  %407 = vmatprep.subr.mxu0 0.0
  %408 = vmatpush1.msra.mxu0 0.0
  %409 = vmatprep.subr.mxu0 0.0
  %410 = vmatpush1.msra.mxu0 0.0
  %411 = vmatprep.subr.mxu0 0.0
  %412 = vmatpush1.msra.mxu0 0.0
  %413 = vmatprep.subr.mxu0 0.0
  %414 = vmatpush1.msra.mxu0 0.0
  %415 = vmatprep.subr.mxu0 0.0
  %416 = vmatpush1.msra.mxu0 0.0
  %417 = vmatprep.subr.mxu0 0.0
  %418 = vmatpush1.msra.mxu0 0.0
  %419 = vmatprep.subr.mxu0 0.0
  %420 = vmatpush1.msra.mxu0 0.0
  %421 = vmatprep.subr.mxu0 0.0
  %422 = vmatpush1.msra.mxu0 0.0
  %423 = vmatprep.subr.mxu0 0.0
  %424 = vmatpush1.msra.mxu0 0.0
  %425 = vmatprep.subr.mxu0 0.0
  %426 = vmatpush1.msra.mxu0 0.0
  %427 = vmatprep.subr.mxu0 0.0
  %428 = vmatpush1.msra.mxu0 0.0
  %429 = vmatprep.subr.mxu0 0.0
  %430 = vmatpush1.msra.mxu0 0.0
  %431 = vmatprep.subr.mxu0 0.0
  %432 = vmatpush1.msra.mxu0 0.0
  %433 = vmatprep.subr.mxu0 0.0
  %434 = vmatpush1.msra.mxu0 0.0
  %435 = vmatprep.subr.mxu0 0.0
  %436 = vmatpush1.msra.mxu0 0.0
  %437 = vmatprep.subr.mxu0 0.0
  %438 = vmatpush1.msra.mxu0 0.0
  %439 = vmatprep.subr.mxu0 0.0
  %440 = vmatpush1.msra.mxu0 0.0
  %441 = vmatprep.subr.mxu0 0.0
  %442 = vmatpush1.msra.mxu0 0.0
  %443 = vmatprep.subr.mxu0 0.0
  %444 = vmatpush1.msra.mxu0 0.0
  %445 = vmatprep.mubr.f32.mxu0 0.0
  %446 = vmatmul.mubr.f32.gmra.mrb[0].mxu0 %v379
  %v447 = vpop.f32.mrb[0].mxu0
  %v448 = vadd.f32 0.0, %v447
  %v449 = vpop.f32.mrb[0].mxu0
  %450 = vdwg.mxu0
  %v452 = vrot.slane %v448, 4
  %v454 = vadd.f32 %v206, %v452
  %v455 = vtanh.pop %v454
  %vm456 = vcmask 62468
  %457 = vst.msk [vmem:[#allocation2] sm:$0x30] %vm456, %v455
  %v459 = vrot.slane %v455, 4
  %v460 = vsel %vm219, %v459, 0
  %462 = vmatprep.subr.mxu0 0.0
  %463 = vmatpush1.msra.mxu0 %v217
  %464 = vmatprep.subr.mxu0 0.0
  %465 = vmatpush1.msra.mxu0 0.0
  %466 = vmatprep.subr.mxu0 0.0
  %467 = vmatpush1.msra.mxu0 0.0
  %468 = vmatprep.subr.mxu0 0.0
  %469 = vmatpush1.msra.mxu0 0.0
  %470 = vmatprep.subr.mxu0 0.0
  %471 = vmatpush1.msra.mxu0 0.0
  %472 = vmatprep.subr.mxu0 0.0
  %473 = vmatpush1.msra.mxu0 0.0
  %474 = vmatprep.subr.mxu0 0.0
  %475 = vmatpush1.msra.mxu0 0.0
  %476 = vmatprep.subr.mxu0 0.0
  %477 = vmatpush1.msra.mxu0 0.0
  %478 = vmatprep.subr.mxu0 0.0
  %479 = vmatpush1.msra.mxu0 0.0
  %480 = vmatprep.subr.mxu0 0.0
  %481 = vmatpush1.msra.mxu0 0.0
  %482 = vmatprep.subr.mxu0 0.0
  %483 = vmatpush1.msra.mxu0 0.0
  %484 = vmatprep.subr.mxu0 0.0
  %485 = vmatpush1.msra.mxu0 0.0
  %486 = vmatprep.subr.mxu0 0.0
  %487 = vmatpush1.msra.mxu0 0.0
  %488 = vmatprep.subr.mxu0 0.0
  %489 = vmatpush1.msra.mxu0 0.0
  %490 = vmatprep.subr.mxu0 0.0
  %491 = vmatpush1.msra.mxu0 0.0
  %492 = vmatprep.subr.mxu0 0.0
  %493 = vmatpush1.msra.mxu0 0.0
  %494 = vmatprep.subr.mxu0 0.0
  %495 = vmatpush1.msra.mxu0 0.0
  %496 = vmatprep.subr.mxu0 0.0
  %497 = vmatpush1.msra.mxu0 0.0
  %498 = vmatprep.subr.mxu0 0.0
  %499 = vmatpush1.msra.mxu0 0.0
  %500 = vmatprep.subr.mxu0 0.0
  %501 = vmatpush1.msra.mxu0 0.0
  %502 = vmatprep.subr.mxu0 0.0
  %503 = vmatpush1.msra.mxu0 0.0
  %504 = vmatprep.subr.mxu0 0.0
  %505 = vmatpush1.msra.mxu0 0.0
  %506 = vmatprep.subr.mxu0 0.0
  %507 = vmatpush1.msra.mxu0 0.0
  %508 = vmatprep.subr.mxu0 0.0
  %509 = vmatpush1.msra.mxu0 0.0
  %510 = vmatprep.subr.mxu0 0.0
  %511 = vmatpush1.msra.mxu0 0.0
  %512 = vmatprep.subr.mxu0 0.0
  %513 = vmatpush1.msra.mxu0 0.0
  %514 = vmatprep.subr.mxu0 0.0
  %515 = vmatpush1.msra.mxu0 0.0
  %516 = vmatprep.subr.mxu0 0.0
  %517 = vmatpush1.msra.mxu0 0.0
  %518 = vmatprep.subr.mxu0 0.0
  %519 = vmatpush1.msra.mxu0 0.0
  %520 = vmatprep.subr.mxu0 0.0
  %521 = vmatpush1.msra.mxu0 0.0
  %522 = vmatprep.subr.mxu0 0.0
  %523 = vmatpush1.msra.mxu0 0.0
  %524 = vmatprep.subr.mxu0 0.0
  %525 = vmatpush1.msra.mxu0 0.0
  %526 = vmatprep.mubr.f32.mxu0 0.0
  %527 = vmatmul.mubr.f32.gmra.mrb[0].mxu0 %v460
  %v528 = vpop.f32.mrb[0].mxu0
  %v529 = vadd.f32 0.0, %v528
  %v530 = vpop.f32.mrb[0].mxu0
  %531 = vdwg.mxu0
  %v533 = vrot.slane %v529, 2
  %v535 = vadd.f32 %v206, %v533
  %v536 = vtanh.pop %v535
  %vm537 = vcmask 64518
  %538 = vst.msk [vmem:[#allocation2] sm:$0xc0] %vm537, %v536
  %v540 = vrot.slane %v536, 6
  %v541 = vsel %vm219, %v540, 0
  %543 = vmatprep.subr.mxu0 0.0
  %544 = vmatpush1.msra.mxu0 %v217
  %545 = vmatprep.subr.mxu0 0.0
  %546 = vmatpush1.msra.mxu0 0.0
  %547 = vmatprep.subr.mxu0 0.0
  %548 = vmatpush1.msra.mxu0 0.0
  %549 = vmatprep.subr.mxu0 0.0
  %550 = vmatpush1.msra.mxu0 0.0
  %551 = vmatprep.subr.mxu0 0.0
  %552 = vmatpush1.msra.mxu0 0.0
  %553 = vmatprep.subr.mxu0 0.0
  %554 = vmatpush1.msra.mxu0 0.0
  %555 = vmatprep.subr.mxu0 0.0
  %556 = vmatpush1.msra.mxu0 0.0
  %557 = vmatprep.subr.mxu0 0.0
  %558 = vmatpush1.msra.mxu0 0.0
  %559 = vmatprep.subr.mxu0 0.0
  %560 = vmatpush1.msra.mxu0 0.0
  %561 = vmatprep.subr.mxu0 0.0
  %562 = vmatpush1.msra.mxu0 0.0
  %563 = vmatprep.subr.mxu0 0.0
  %564 = vmatpush1.msra.mxu0 0.0
  %565 = vmatprep.subr.mxu0 0.0
  %566 = vmatpush1.msra.mxu0 0.0
  %567 = vmatprep.subr.mxu0 0.0
  %568 = vmatpush1.msra.mxu0 0.0
  %569 = vmatprep.subr.mxu0 0.0
  %570 = vmatpush1.msra.mxu0 0.0
  %571 = vmatprep.subr.mxu0 0.0
  %572 = vmatpush1.msra.mxu0 0.0
  %573 = vmatprep.subr.mxu0 0.0
  %574 = vmatpush1.msra.mxu0 0.0
  %575 = vmatprep.subr.mxu0 0.0
  %576 = vmatpush1.msra.mxu0 0.0
  %577 = vmatprep.subr.mxu0 0.0
  %578 = vmatpush1.msra.mxu0 0.0
  %579 = vmatprep.subr.mxu0 0.0
  %580 = vmatpush1.msra.mxu0 0.0
  %581 = vmatprep.subr.mxu0 0.0
  %582 = vmatpush1.msra.mxu0 0.0
  %583 = vmatprep.subr.mxu0 0.0
  %584 = vmatpush1.msra.mxu0 0.0
  %585 = vmatprep.subr.mxu0 0.0
  %586 = vmatpush1.msra.mxu0 0.0
  %587 = vmatprep.subr.mxu0 0.0
  %588 = vmatpush1.msra.mxu0 0.0
  %589 = vmatprep.subr.mxu0 0.0
  %590 = vmatpush1.msra.mxu0 0.0
  %591 = vmatprep.subr.mxu0 0.0
  %592 = vmatpush1.msra.mxu0 0.0
  %593 = vmatprep.subr.mxu0 0.0
  %594 = vmatpush1.msra.mxu0 0.0
  %595 = vmatprep.subr.mxu0 0.0
  %596 = vmatpush1.msra.mxu0 0.0
  %597 = vmatprep.subr.mxu0 0.0
  %598 = vmatpush1.msra.mxu0 0.0
  %599 = vmatprep.subr.mxu0 0.0
  %600 = vmatpush1.msra.mxu0 0.0
  %601 = vmatprep.subr.mxu0 0.0
  %602 = vmatpush1.msra.mxu0 0.0
  %603 = vmatprep.subr.mxu0 0.0
  %604 = vmatpush1.msra.mxu0 0.0
  %605 = vmatprep.subr.mxu0 0.0
  %606 = vmatpush1.msra.mxu0 0.0
  %607 = vmatprep.mubr.f32.mxu0 0.0
  %608 = vmatmul.mubr.f32.gmra.mrb[0].mxu0 %v541
  %v609 = vpop.f32.mrb[0].mxu0
  %v610 = vadd.f32 0.0, %v609
  %v611 = vpop.f32.mrb[0].mxu0
  %612 = vdwg.mxu0
  %v613 = vadd.f32 %v211, %v610
  %v614 = vtanh.pop %v613
  %615 = vst.msk [vmem:[#allocation2 + $0x8] sm:$0x3] %vm295, %v614
  %v617 = vsel %vm219, %v614, 0
  %619 = vmatprep.subr.mxu0 0.0
  %620 = vmatpush1.msra.mxu0 %v217
  %621 = vmatprep.subr.mxu0 0.0
  %622 = vmatpush1.msra.mxu0 0.0
  %623 = vmatprep.subr.mxu0 0.0
  %624 = vmatpush1.msra.mxu0 0.0
  %625 = vmatprep.subr.mxu0 0.0
  %626 = vmatpush1.msra.mxu0 0.0
  %627 = vmatprep.subr.mxu0 0.0
  %628 = vmatpush1.msra.mxu0 0.0
  %629 = vmatprep.subr.mxu0 0.0
  %630 = vmatpush1.msra.mxu0 0.0
  %631 = vmatprep.subr.mxu0 0.0
  %632 = vmatpush1.msra.mxu0 0.0
  %633 = vmatprep.subr.mxu0 0.0
  %634 = vmatpush1.msra.mxu0 0.0
  %635 = vmatprep.subr.mxu0 0.0
  %636 = vmatpush1.msra.mxu0 0.0
  %637 = vmatprep.subr.mxu0 0.0
  %638 = vmatpush1.msra.mxu0 0.0
  %639 = vmatprep.subr.mxu0 0.0
  %640 = vmatpush1.msra.mxu0 0.0
  %641 = vmatprep.subr.mxu0 0.0
  %642 = vmatpush1.msra.mxu0 0.0
  %643 = vmatprep.subr.mxu0 0.0
  %644 = vmatpush1.msra.mxu0 0.0
  %645 = vmatprep.subr.mxu0 0.0
  %646 = vmatpush1.msra.mxu0 0.0
  %647 = vmatprep.subr.mxu0 0.0
  %648 = vmatpush1.msra.mxu0 0.0
  %649 = vmatprep.subr.mxu0 0.0
  %650 = vmatpush1.msra.mxu0 0.0
  %651 = vmatprep.subr.mxu0 0.0
  %652 = vmatpush1.msra.mxu0 0.0
  %653 = vmatprep.subr.mxu0 0.0
  %654 = vmatpush1.msra.mxu0 0.0
  %655 = vmatprep.subr.mxu0 0.0
  %656 = vmatpush1.msra.mxu0 0.0
  %657 = vmatprep.subr.mxu0 0.0
  %658 = vmatpush1.msra.mxu0 0.0
  %659 = vmatprep.subr.mxu0 0.0
  %660 = vmatpush1.msra.mxu0 0.0
  %661 = vmatprep.subr.mxu0 0.0
  %662 = vmatpush1.msra.mxu0 0.0
  %663 = vmatprep.subr.mxu0 0.0
  %664 = vmatpush1.msra.mxu0 0.0
  %665 = vmatprep.subr.mxu0 0.0
  %666 = vmatpush1.msra.mxu0 0.0
  %667 = vmatprep.subr.mxu0 0.0
  %668 = vmatpush1.msra.mxu0 0.0
  %669 = vmatprep.subr.mxu0 0.0
  %670 = vmatpush1.msra.mxu0 0.0
  %671 = vmatprep.subr.mxu0 0.0
  %672 = vmatpush1.msra.mxu0 0.0
  %673 = vmatprep.subr.mxu0 0.0
  %674 = vmatpush1.msra.mxu0 0.0
  %675 = vmatprep.subr.mxu0 0.0
  %676 = vmatpush1.msra.mxu0 0.0
  %677 = vmatprep.subr.mxu0 0.0
  %678 = vmatpush1.msra.mxu0 0.0
  %679 = vmatprep.subr.mxu0 0.0
  %680 = vmatpush1.msra.mxu0 0.0
  %681 = vmatprep.subr.mxu0 0.0
  %682 = vmatpush1.msra.mxu0 0.0
  %683 = vmatprep.mubr.f32.mxu0 0.0
  %684 = vmatmul.mubr.f32.gmra.mrb[0].mxu0 %v617
  %v685 = vpop.f32.mrb[0].mxu0
  %v686 = vadd.f32 0.0, %v685
  %v687 = vpop.f32.mrb[0].mxu0
  %688 = vdwg.mxu0
  %v690 = vrot.slane %v686, 6
  %v692 = vadd.f32 %v211, %v690
  %v693 = vtanh.pop %v692
  %694 = vst.msk [vmem:[#allocation2 + $0x8] sm:$0xc] %vm375, %v693
  %v696 = vrot.slane %v693, 2
  %v697 = vsel %vm219, %v696, 0
  %699 = vmatprep.subr.mxu0 0.0
  %700 = vmatpush1.msra.mxu0 %v217
  %701 = vmatprep.subr.mxu0 0.0
  %702 = vmatpush1.msra.mxu0 0.0
  %703 = vmatprep.subr.mxu0 0.0
  %704 = vmatpush1.msra.mxu0 0.0
  %705 = vmatprep.subr.mxu0 0.0
  %706 = vmatpush1.msra.mxu0 0.0
  %707 = vmatprep.subr.mxu0 0.0
  %708 = vmatpush1.msra.mxu0 0.0
  %709 = vmatprep.subr.mxu0 0.0
  %710 = vmatpush1.msra.mxu0 0.0
  %711 = vmatprep.subr.mxu0 0.0
  %712 = vmatpush1.msra.mxu0 0.0
  %713 = vmatprep.subr.mxu0 0.0
  %714 = vmatpush1.msra.mxu0 0.0
  %715 = vmatprep.subr.mxu0 0.0
  %716 = vmatpush1.msra.mxu0 0.0
  %717 = vmatprep.subr.mxu0 0.0
  %718 = vmatpush1.msra.mxu0 0.0
  %719 = vmatprep.subr.mxu0 0.0
  %720 = vmatpush1.msra.mxu0 0.0
  %721 = vmatprep.subr.mxu0 0.0
  %722 = vmatpush1.msra.mxu0 0.0
  %723 = vmatprep.subr.mxu0 0.0
  %724 = vmatpush1.msra.mxu0 0.0
  %725 = vmatprep.subr.mxu0 0.0
  %726 = vmatpush1.msra.mxu0 0.0
  %727 = vmatprep.subr.mxu0 0.0
  %728 = vmatpush1.msra.mxu0 0.0
  %729 = vmatprep.subr.mxu0 0.0
  %730 = vmatpush1.msra.mxu0 0.0
  %731 = vmatprep.subr.mxu0 0.0
  %732 = vmatpush1.msra.mxu0 0.0
  %733 = vmatprep.subr.mxu0 0.0
  %734 = vmatpush1.msra.mxu0 0.0
  %735 = vmatprep.subr.mxu0 0.0
  %736 = vmatpush1.msra.mxu0 0.0
  %737 = vmatprep.subr.mxu0 0.0
  %738 = vmatpush1.msra.mxu0 0.0
  %739 = vmatprep.subr.mxu0 0.0
  %740 = vmatpush1.msra.mxu0 0.0
  %741 = vmatprep.subr.mxu0 0.0
  %742 = vmatpush1.msra.mxu0 0.0
  %743 = vmatprep.subr.mxu0 0.0
  %744 = vmatpush1.msra.mxu0 0.0
  %745 = vmatprep.subr.mxu0 0.0
  %746 = vmatpush1.msra.mxu0 0.0
  %747 = vmatprep.subr.mxu0 0.0
  %748 = vmatpush1.msra.mxu0 0.0
  %749 = vmatprep.subr.mxu0 0.0
  %750 = vmatpush1.msra.mxu0 0.0
  %751 = vmatprep.subr.mxu0 0.0
  %752 = vmatpush1.msra.mxu0 0.0
  %753 = vmatprep.subr.mxu0 0.0
  %754 = vmatpush1.msra.mxu0 0.0
  %755 = vmatprep.subr.mxu0 0.0
  %756 = vmatpush1.msra.mxu0 0.0
  %757 = vmatprep.subr.mxu0 0.0
  %758 = vmatpush1.msra.mxu0 0.0
  %759 = vmatprep.subr.mxu0 0.0
  %760 = vmatpush1.msra.mxu0 0.0
  %761 = vmatprep.subr.mxu0 0.0
  %762 = vmatpush1.msra.mxu0 0.0
  %763 = vmatprep.mubr.f32.mxu0 0.0
  %764 = vmatmul.mubr.f32.gmra.mrb[0].mxu0 %v697
  %v765 = vpop.f32.mrb[0].mxu0
  %v766 = vadd.f32 0.0, %v765
  %v767 = vpop.f32.mrb[0].mxu0
  %768 = vdwg.mxu0
  %v770 = vrot.slane %v766, 4
  %v772 = vadd.f32 %v211, %v770
  %v773 = vtanh.pop %v772
  %774 = vst.msk [vmem:[#allocation2 + $0x8] sm:$0x30] %vm456, %v773
  %v776 = vrot.slane %v773, 4
  %v777 = vsel %vm219, %v776, 0
  %779 = vmatprep.subr.mxu0 0.0
  %780 = vmatpush1.msra.mxu0 %v217
  %781 = vmatprep.subr.mxu0 0.0
  %782 = vmatpush1.msra.mxu0 0.0
  %783 = vmatprep.subr.mxu0 0.0
  %784 = vmatpush1.msra.mxu0 0.0
  %785 = vmatprep.subr.mxu0 0.0
  %786 = vmatpush1.msra.mxu0 0.0
  %787 = vmatprep.subr.mxu0 0.0
  %788 = vmatpush1.msra.mxu0 0.0
  %789 = vmatprep.subr.mxu0 0.0
  %790 = vmatpush1.msra.mxu0 0.0
  %791 = vmatprep.subr.mxu0 0.0
  %792 = vmatpush1.msra.mxu0 0.0
  %793 = vmatprep.subr.mxu0 0.0
  %794 = vmatpush1.msra.mxu0 0.0
  %795 = vmatprep.subr.mxu0 0.0
  %796 = vmatpush1.msra.mxu0 0.0
  %797 = vmatprep.subr.mxu0 0.0
  %798 = vmatpush1.msra.mxu0 0.0
  %799 = vmatprep.subr.mxu0 0.0
  %800 = vmatpush1.msra.mxu0 0.0
  %801 = vmatprep.subr.mxu0 0.0
  %802 = vmatpush1.msra.mxu0 0.0
  %803 = vmatprep.subr.mxu0 0.0
  %804 = vmatpush1.msra.mxu0 0.0
  %805 = vmatprep.subr.mxu0 0.0
  %806 = vmatpush1.msra.mxu0 0.0
  %807 = vmatprep.subr.mxu0 0.0
  %808 = vmatpush1.msra.mxu0 0.0
  %809 = vmatprep.subr.mxu0 0.0
  %810 = vmatpush1.msra.mxu0 0.0
  %811 = vmatprep.subr.mxu0 0.0
  %812 = vmatpush1.msra.mxu0 0.0
  %813 = vmatprep.subr.mxu0 0.0
  %814 = vmatpush1.msra.mxu0 0.0
  %815 = vmatprep.subr.mxu0 0.0
  %816 = vmatpush1.msra.mxu0 0.0
  %817 = vmatprep.subr.mxu0 0.0
  %818 = vmatpush1.msra.mxu0 0.0
  %819 = vmatprep.subr.mxu0 0.0
  %820 = vmatpush1.msra.mxu0 0.0
  %821 = vmatprep.subr.mxu0 0.0
  %822 = vmatpush1.msra.mxu0 0.0
  %823 = vmatprep.subr.mxu0 0.0
  %824 = vmatpush1.msra.mxu0 0.0
  %825 = vmatprep.subr.mxu0 0.0
  %826 = vmatpush1.msra.mxu0 0.0
  %827 = vmatprep.subr.mxu0 0.0
  %828 = vmatpush1.msra.mxu0 0.0
  %829 = vmatprep.subr.mxu0 0.0
  %830 = vmatpush1.msra.mxu0 0.0
  %831 = vmatprep.subr.mxu0 0.0
  %832 = vmatpush1.msra.mxu0 0.0
  %833 = vmatprep.subr.mxu0 0.0
  %834 = vmatpush1.msra.mxu0 0.0
  %835 = vmatprep.subr.mxu0 0.0
  %836 = vmatpush1.msra.mxu0 0.0
  %837 = vmatprep.subr.mxu0 0.0
  %838 = vmatpush1.msra.mxu0 0.0
  %839 = vmatprep.subr.mxu0 0.0
  %840 = vmatpush1.msra.mxu0 0.0
  %841 = vmatprep.subr.mxu0 0.0
  %842 = vmatpush1.msra.mxu0 0.0
  %843 = vmatprep.mubr.f32.mxu0 0.0
  %844 = vmatmul.mubr.f32.gmra.mrb[0].mxu0 %v777
  %v845 = vpop.f32.mrb[0].mxu0
  %v846 = vadd.f32 0.0, %v845
  %v847 = vpop.f32.mrb[0].mxu0
  %848 = vdwg.mxu0
  %v850 = vrot.slane %v846, 2
  %v852 = vadd.f32 %v211, %v850
  %v853 = vtanh.pop %v852
  %854 = vst.msk [vmem:[#allocation2 + $0x8] sm:$0xc0] %vm537, %v853
  %v855 = vld [vmem:[#allocation2] sm:$0xff]
  %v856 = vld [vmem:[#allocation2 + $0x8] sm:$0xff]
  %v857 = vlaneseq
  %v858 = vshrl.u32 %v857, 7
  %v859 = vsub.s32 7, %v858
  %v860 = vrot.slane %v15, %v859
  %vm862 = vcmask 1040384
  %v863 = vrot.slane %v13, 7
  %v864 = vrot.slane %v14, 7
  %v865 = vsel %vm862, %v863, %v864
  %v868 = vsel %vm219, %v855, 0
  %v871 = vsel %vm219, %v856, 0
  %873 = vmatprep.subr.mxu0 0.0
  %874 = vmatpush1.msra.mxu0 %v865
  %875 = vmatprep.subr.mxu0 0.0
  %876 = vmatpush1.msra.mxu0 0.0
  %877 = vmatprep.subr.mxu0 0.0
  %878 = vmatpush1.msra.mxu0 0.0
  %879 = vmatprep.subr.mxu0 0.0
  %880 = vmatpush1.msra.mxu0 0.0
  %881 = vmatprep.subr.mxu0 0.0
  %882 = vmatpush1.msra.mxu0 0.0
  %883 = vmatprep.subr.mxu0 0.0
  %884 = vmatpush1.msra.mxu0 0.0
  %885 = vmatprep.subr.mxu0 0.0
  %886 = vmatpush1.msra.mxu0 0.0
  %887 = vmatprep.subr.mxu0 0.0
  %888 = vmatpush1.msra.mxu0 0.0
  %889 = vmatprep.subr.mxu0 0.0
  %890 = vmatpush1.msra.mxu0 0.0
  %891 = vmatprep.subr.mxu0 0.0
  %892 = vmatpush1.msra.mxu0 0.0
  %893 = vmatprep.subr.mxu0 0.0
  %894 = vmatpush1.msra.mxu0 0.0
  %895 = vmatprep.subr.mxu0 0.0
  %896 = vmatpush1.msra.mxu0 0.0
  %897 = vmatprep.subr.mxu0 0.0
  %898 = vmatpush1.msra.mxu0 0.0
  %899 = vmatprep.subr.mxu0 0.0
  %900 = vmatpush1.msra.mxu0 0.0
  %901 = vmatprep.subr.mxu0 0.0
  %902 = vmatpush1.msra.mxu0 0.0
  %903 = vmatprep.subr.mxu0 0.0
  %904 = vmatpush1.msra.mxu0 0.0
  %905 = vmatprep.subr.mxu0 0.0
  %906 = vmatpush1.msra.mxu0 0.0
  %907 = vmatprep.subr.mxu0 0.0
  %908 = vmatpush1.msra.mxu0 0.0
  %909 = vmatprep.subr.mxu0 0.0
  %910 = vmatpush1.msra.mxu0 0.0
  %911 = vmatprep.subr.mxu0 0.0
  %912 = vmatpush1.msra.mxu0 0.0
  %913 = vmatprep.subr.mxu0 0.0
  %914 = vmatpush1.msra.mxu0 0.0
  %915 = vmatprep.subr.mxu0 0.0
  %916 = vmatpush1.msra.mxu0 0.0
  %917 = vmatprep.subr.mxu0 0.0
  %918 = vmatpush1.msra.mxu0 0.0
  %919 = vmatprep.subr.mxu0 0.0
  %920 = vmatpush1.msra.mxu0 0.0
  %921 = vmatprep.subr.mxu0 0.0
  %922 = vmatpush1.msra.mxu0 0.0
  %923 = vmatprep.subr.mxu0 0.0
  %924 = vmatpush1.msra.mxu0 0.0
  %925 = vmatprep.subr.mxu0 0.0
  %926 = vmatpush1.msra.mxu0 0.0
  %927 = vmatprep.subr.mxu0 0.0
  %928 = vmatpush1.msra.mxu0 0.0
  %929 = vmatprep.subr.mxu0 0.0
  %930 = vmatpush1.msra.mxu0 0.0
  %931 = vmatprep.subr.mxu0 0.0
  %932 = vmatpush1.msra.mxu0 0.0
  %933 = vmatprep.subr.mxu0 0.0
  %934 = vmatpush1.msra.mxu0 0.0
  %935 = vmatprep.subr.mxu0 0.0
  %936 = vmatpush1.msra.mxu0 0.0
  %937 = vmatprep.mubr.f32.mxu0 0.0
  %938 = vmatmul.mubr.f32.gmra.mrb[0].mxu0 %v868
  %v939 = vpop.f32.mrb[0].mxu0
  %v940 = vadd.f32 %v860, %v939
  %v941 = vpop.f32.mrb[0].mxu0
  %942 = vmatprep.mubr.f32.mxu0 0.0
  %943 = vmatmul.mubr.f32.gmra.mrb[0].mxu0 %v871
  %v944 = vpop.f32.mrb[0].mxu0
  %v945 = vadd.f32 %v860, %v944
  %v946 = vpop.f32.mrb[0].mxu0
  %947 = vdwg.mxu0
  %v949 = vrot.slane %v15, 7
  %v950 = vsel %vm862, %v864, %v949
  %952 = vmatprep.subr.mxu0 0.0
  %953 = vmatpush1.msra.mxu0 %v950
  %954 = vmatprep.subr.mxu0 0.0
  %955 = vmatpush1.msra.mxu0 0.0
  %956 = vmatprep.subr.mxu0 0.0
  %957 = vmatpush1.msra.mxu0 0.0
  %958 = vmatprep.subr.mxu0 0.0
  %959 = vmatpush1.msra.mxu0 0.0
  %960 = vmatprep.subr.mxu0 0.0
  %961 = vmatpush1.msra.mxu0 0.0
  %962 = vmatprep.subr.mxu0 0.0
  %963 = vmatpush1.msra.mxu0 0.0
  %964 = vmatprep.subr.mxu0 0.0
  %965 = vmatpush1.msra.mxu0 0.0
  %966 = vmatprep.subr.mxu0 0.0
  %967 = vmatpush1.msra.mxu0 0.0
  %968 = vmatprep.subr.mxu0 0.0
  %969 = vmatpush1.msra.mxu0 0.0
  %970 = vmatprep.subr.mxu0 0.0
  %971 = vmatpush1.msra.mxu0 0.0
  %972 = vmatprep.subr.mxu0 0.0
  %973 = vmatpush1.msra.mxu0 0.0
  %974 = vmatprep.subr.mxu0 0.0
  %975 = vmatpush1.msra.mxu0 0.0
  %976 = vmatprep.subr.mxu0 0.0
  %977 = vmatpush1.msra.mxu0 0.0
  %978 = vmatprep.subr.mxu0 0.0
  %979 = vmatpush1.msra.mxu0 0.0
  %980 = vmatprep.subr.mxu0 0.0
  %981 = vmatpush1.msra.mxu0 0.0
  %982 = vmatprep.subr.mxu0 0.0
  %983 = vmatpush1.msra.mxu0 0.0
  %984 = vmatprep.subr.mxu0 0.0
  %985 = vmatpush1.msra.mxu0 0.0
  %986 = vmatprep.subr.mxu0 0.0
  %987 = vmatpush1.msra.mxu0 0.0
  %988 = vmatprep.subr.mxu0 0.0
  %989 = vmatpush1.msra.mxu0 0.0
  %990 = vmatprep.subr.mxu0 0.0
  %991 = vmatpush1.msra.mxu0 0.0
  %992 = vmatprep.subr.mxu0 0.0
  %993 = vmatpush1.msra.mxu0 0.0
  %994 = vmatprep.subr.mxu0 0.0
  %995 = vmatpush1.msra.mxu0 0.0
  %996 = vmatprep.subr.mxu0 0.0
  %997 = vmatpush1.msra.mxu0 0.0
  %998 = vmatprep.subr.mxu0 0.0
  %999 = vmatpush1.msra.mxu0 0.0
  %1000 = vmatprep.subr.mxu0 0.0
  %1001 = vmatpush1.msra.mxu0 0.0
  %1002 = vmatprep.subr.mxu0 0.0
  %1003 = vmatpush1.msra.mxu0 0.0
  %1004 = vmatprep.subr.mxu0 0.0
  %1005 = vmatpush1.msra.mxu0 0.0
  %1006 = vmatprep.subr.mxu0 0.0
  %1007 = vmatpush1.msra.mxu0 0.0
  %1008 = vmatprep.subr.mxu0 0.0
  %1009 = vmatpush1.msra.mxu0 0.0
  %1010 = vmatprep.subr.mxu0 0.0
  %1011 = vmatpush1.msra.mxu0 0.0
  %1012 = vmatprep.subr.mxu0 0.0
  %1013 = vmatpush1.msra.mxu0 0.0
  %1014 = vmatprep.subr.mxu0 0.0
  %1015 = vmatpush1.msra.mxu0 0.0
  %1016 = vmatprep.mubr.f32.mxu0 0.0
  %1017 = vmatmul.mubr.f32.gmra.mrb[0].mxu0 %v221
  %v1018 = vpop.f32.mrb[0].mxu0
  %v1019 = vadd.f32 0.0, %v1018
  %v1020 = vpop.f32.mrb[0].mxu0
  %1021 = vdwg.mxu0
  %v1022 = vadd.f32 %v940, %v1019
  %v1023 = vtanh.pop %v1022
  %1024 = vst.msk [vmem:[#allocation3] sm:$0x3] %vm295, %v1023
  %v1026 = vsel %vm219, %v1023, 0
  %1028 = vmatprep.subr.mxu0 0.0
  %1029 = vmatpush1.msra.mxu0 %v950
  %1030 = vmatprep.subr.mxu0 0.0
  %1031 = vmatpush1.msra.mxu0 0.0
  %1032 = vmatprep.subr.mxu0 0.0
  %1033 = vmatpush1.msra.mxu0 0.0
  %1034 = vmatprep.subr.mxu0 0.0
  %1035 = vmatpush1.msra.mxu0 0.0
  %1036 = vmatprep.subr.mxu0 0.0
  %1037 = vmatpush1.msra.mxu0 0.0
  %1038 = vmatprep.subr.mxu0 0.0
  %1039 = vmatpush1.msra.mxu0 0.0
  %1040 = vmatprep.subr.mxu0 0.0
  %1041 = vmatpush1.msra.mxu0 0.0
  %1042 = vmatprep.subr.mxu0 0.0
  %1043 = vmatpush1.msra.mxu0 0.0
  %1044 = vmatprep.subr.mxu0 0.0
  %1045 = vmatpush1.msra.mxu0 0.0
  %1046 = vmatprep.subr.mxu0 0.0
  %1047 = vmatpush1.msra.mxu0 0.0
  %1048 = vmatprep.subr.mxu0 0.0
  %1049 = vmatpush1.msra.mxu0 0.0
  %1050 = vmatprep.subr.mxu0 0.0
  %1051 = vmatpush1.msra.mxu0 0.0
  %1052 = vmatprep.subr.mxu0 0.0
  %1053 = vmatpush1.msra.mxu0 0.0
  %1054 = vmatprep.subr.mxu0 0.0
  %1055 = vmatpush1.msra.mxu0 0.0
  %1056 = vmatprep.subr.mxu0 0.0
  %1057 = vmatpush1.msra.mxu0 0.0
  %1058 = vmatprep.subr.mxu0 0.0
  %1059 = vmatpush1.msra.mxu0 0.0
  %1060 = vmatprep.subr.mxu0 0.0
  %1061 = vmatpush1.msra.mxu0 0.0
  %1062 = vmatprep.subr.mxu0 0.0
  %1063 = vmatpush1.msra.mxu0 0.0
  %1064 = vmatprep.subr.mxu0 0.0
  %1065 = vmatpush1.msra.mxu0 0.0
  %1066 = vmatprep.subr.mxu0 0.0
  %1067 = vmatpush1.msra.mxu0 0.0
  %1068 = vmatprep.subr.mxu0 0.0
  %1069 = vmatpush1.msra.mxu0 0.0
  %1070 = vmatprep.subr.mxu0 0.0
  %1071 = vmatpush1.msra.mxu0 0.0
  %1072 = vmatprep.subr.mxu0 0.0
  %1073 = vmatpush1.msra.mxu0 0.0
  %1074 = vmatprep.subr.mxu0 0.0
  %1075 = vmatpush1.msra.mxu0 0.0
  %1076 = vmatprep.subr.mxu0 0.0
  %1077 = vmatpush1.msra.mxu0 0.0
  %1078 = vmatprep.subr.mxu0 0.0
  %1079 = vmatpush1.msra.mxu0 0.0
  %1080 = vmatprep.subr.mxu0 0.0
  %1081 = vmatpush1.msra.mxu0 0.0
  %1082 = vmatprep.subr.mxu0 0.0
  %1083 = vmatpush1.msra.mxu0 0.0
  %1084 = vmatprep.subr.mxu0 0.0
  %1085 = vmatpush1.msra.mxu0 0.0
  %1086 = vmatprep.subr.mxu0 0.0
  %1087 = vmatpush1.msra.mxu0 0.0
  %1088 = vmatprep.subr.mxu0 0.0
  %1089 = vmatpush1.msra.mxu0 0.0
  %1090 = vmatprep.subr.mxu0 0.0
  %1091 = vmatpush1.msra.mxu0 0.0
  %1092 = vmatprep.mubr.f32.mxu0 0.0
  %1093 = vmatmul.mubr.f32.gmra.mrb[0].mxu0 %v1026
  %v1094 = vpop.f32.mrb[0].mxu0
  %v1095 = vadd.f32 0.0, %v1094
  %v1096 = vpop.f32.mrb[0].mxu0
  %1097 = vdwg.mxu0
  %v1099 = vrot.slane %v1095, 6
  %v1101 = vadd.f32 %v940, %v1099
  %v1102 = vtanh.pop %v1101
  %1103 = vst.msk [vmem:[#allocation3] sm:$0xc] %vm375, %v1102
  %v1105 = vrot.slane %v1102, 2
  %v1106 = vsel %vm219, %v1105, 0
  %1108 = vmatprep.subr.mxu0 0.0
  %1109 = vmatpush1.msra.mxu0 %v950
  %1110 = vmatprep.subr.mxu0 0.0
  %1111 = vmatpush1.msra.mxu0 0.0
  %1112 = vmatprep.subr.mxu0 0.0
  %1113 = vmatpush1.msra.mxu0 0.0
  %1114 = vmatprep.subr.mxu0 0.0
  %1115 = vmatpush1.msra.mxu0 0.0
  %1116 = vmatprep.subr.mxu0 0.0
  %1117 = vmatpush1.msra.mxu0 0.0
  %1118 = vmatprep.subr.mxu0 0.0
  %1119 = vmatpush1.msra.mxu0 0.0
  %1120 = vmatprep.subr.mxu0 0.0
  %1121 = vmatpush1.msra.mxu0 0.0
  %1122 = vmatprep.subr.mxu0 0.0
  %1123 = vmatpush1.msra.mxu0 0.0
  %1124 = vmatprep.subr.mxu0 0.0
  %1125 = vmatpush1.msra.mxu0 0.0
  %1126 = vmatprep.subr.mxu0 0.0
  %1127 = vmatpush1.msra.mxu0 0.0
  %1128 = vmatprep.subr.mxu0 0.0
  %1129 = vmatpush1.msra.mxu0 0.0
  %1130 = vmatprep.subr.mxu0 0.0
  %1131 = vmatpush1.msra.mxu0 0.0
  %1132 = vmatprep.subr.mxu0 0.0
  %1133 = vmatpush1.msra.mxu0 0.0
  %1134 = vmatprep.subr.mxu0 0.0
  %1135 = vmatpush1.msra.mxu0 0.0
  %1136 = vmatprep.subr.mxu0 0.0
  %1137 = vmatpush1.msra.mxu0 0.0
  %1138 = vmatprep.subr.mxu0 0.0
  %1139 = vmatpush1.msra.mxu0 0.0
  %1140 = vmatprep.subr.mxu0 0.0
  %1141 = vmatpush1.msra.mxu0 0.0
  %1142 = vmatprep.subr.mxu0 0.0
  %1143 = vmatpush1.msra.mxu0 0.0
  %1144 = vmatprep.subr.mxu0 0.0
  %1145 = vmatpush1.msra.mxu0 0.0
  %1146 = vmatprep.subr.mxu0 0.0
  %1147 = vmatpush1.msra.mxu0 0.0
  %1148 = vmatprep.subr.mxu0 0.0
  %1149 = vmatpush1.msra.mxu0 0.0
  %1150 = vmatprep.subr.mxu0 0.0
  %1151 = vmatpush1.msra.mxu0 0.0
  %1152 = vmatprep.subr.mxu0 0.0
  %1153 = vmatpush1.msra.mxu0 0.0
  %1154 = vmatprep.subr.mxu0 0.0
  %1155 = vmatpush1.msra.mxu0 0.0
  %1156 = vmatprep.subr.mxu0 0.0
  %1157 = vmatpush1.msra.mxu0 0.0
  %1158 = vmatprep.subr.mxu0 0.0
  %1159 = vmatpush1.msra.mxu0 0.0
  %1160 = vmatprep.subr.mxu0 0.0
  %1161 = vmatpush1.msra.mxu0 0.0
  %1162 = vmatprep.subr.mxu0 0.0
  %1163 = vmatpush1.msra.mxu0 0.0
  %1164 = vmatprep.subr.mxu0 0.0
  %1165 = vmatpush1.msra.mxu0 0.0
  %1166 = vmatprep.subr.mxu0 0.0
  %1167 = vmatpush1.msra.mxu0 0.0
  %1168 = vmatprep.subr.mxu0 0.0
  %1169 = vmatpush1.msra.mxu0 0.0
  %1170 = vmatprep.subr.mxu0 0.0
  %1171 = vmatpush1.msra.mxu0 0.0
  %1172 = vmatprep.mubr.f32.mxu0 0.0
  %1173 = vmatmul.mubr.f32.gmra.mrb[0].mxu0 %v1106
  %v1174 = vpop.f32.mrb[0].mxu0
  %v1175 = vadd.f32 0.0, %v1174
  %v1176 = vpop.f32.mrb[0].mxu0
  %1177 = vdwg.mxu0
  %v1179 = vrot.slane %v1175, 4
  %v1181 = vadd.f32 %v940, %v1179
  %v1182 = vtanh.pop %v1181
  %1183 = vst.msk [vmem:[#allocation3] sm:$0x30] %vm456, %v1182
  %v1185 = vrot.slane %v1182, 4
  %v1186 = vsel %vm219, %v1185, 0
  %1188 = vmatprep.subr.mxu0 0.0
  %1189 = vmatpush1.msra.mxu0 %v950
  %1190 = vmatprep.subr.mxu0 0.0
  %1191 = vmatpush1.msra.mxu0 0.0
  %1192 = vmatprep.subr.mxu0 0.0
  %1193 = vmatpush1.msra.mxu0 0.0
  %1194 = vmatprep.subr.mxu0 0.0
  %1195 = vmatpush1.msra.mxu0 0.0
  %1196 = vmatprep.subr.mxu0 0.0
  %1197 = vmatpush1.msra.mxu0 0.0
  %1198 = vmatprep.subr.mxu0 0.0
  %1199 = vmatpush1.msra.mxu0 0.0
  %1200 = vmatprep.subr.mxu0 0.0
  %1201 = vmatpush1.msra.mxu0 0.0
  %1202 = vmatprep.subr.mxu0 0.0
  %1203 = vmatpush1.msra.mxu0 0.0
  %1204 = vmatprep.subr.mxu0 0.0
  %1205 = vmatpush1.msra.mxu0 0.0
  %1206 = vmatprep.subr.mxu0 0.0
  %1207 = vmatpush1.msra.mxu0 0.0
  %1208 = vmatprep.subr.mxu0 0.0
  %1209 = vmatpush1.msra.mxu0 0.0
  %1210 = vmatprep.subr.mxu0 0.0
  %1211 = vmatpush1.msra.mxu0 0.0
  %1212 = vmatprep.subr.mxu0 0.0
  %1213 = vmatpush1.msra.mxu0 0.0
  %1214 = vmatprep.subr.mxu0 0.0
  %1215 = vmatpush1.msra.mxu0 0.0
  %1216 = vmatprep.subr.mxu0 0.0
  %1217 = vmatpush1.msra.mxu0 0.0
  %1218 = vmatprep.subr.mxu0 0.0
  %1219 = vmatpush1.msra.mxu0 0.0
  %1220 = vmatprep.subr.mxu0 0.0
  %1221 = vmatpush1.msra.mxu0 0.0
  %1222 = vmatprep.subr.mxu0 0.0
  %1223 = vmatpush1.msra.mxu0 0.0
  %1224 = vmatprep.subr.mxu0 0.0
  %1225 = vmatpush1.msra.mxu0 0.0
  %1226 = vmatprep.subr.mxu0 0.0
  %1227 = vmatpush1.msra.mxu0 0.0
  %1228 = vmatprep.subr.mxu0 0.0
  %1229 = vmatpush1.msra.mxu0 0.0
  %1230 = vmatprep.subr.mxu0 0.0
  %1231 = vmatpush1.msra.mxu0 0.0
  %1232 = vmatprep.subr.mxu0 0.0
  %1233 = vmatpush1.msra.mxu0 0.0
  %1234 = vmatprep.subr.mxu0 0.0
  %1235 = vmatpush1.msra.mxu0 0.0
  %1236 = vmatprep.subr.mxu0 0.0
  %1237 = vmatpush1.msra.mxu0 0.0
  %1238 = vmatprep.subr.mxu0 0.0
  %1239 = vmatpush1.msra.mxu0 0.0
  %1240 = vmatprep.subr.mxu0 0.0
  %1241 = vmatpush1.msra.mxu0 0.0
  %1242 = vmatprep.subr.mxu0 0.0
  %1243 = vmatpush1.msra.mxu0 0.0
  %1244 = vmatprep.subr.mxu0 0.0
  %1245 = vmatpush1.msra.mxu0 0.0
  %1246 = vmatprep.subr.mxu0 0.0
  %1247 = vmatpush1.msra.mxu0 0.0
  %1248 = vmatprep.subr.mxu0 0.0
  %1249 = vmatpush1.msra.mxu0 0.0
  %1250 = vmatprep.subr.mxu0 0.0
  %1251 = vmatpush1.msra.mxu0 0.0
  %1252 = vmatprep.mubr.f32.mxu0 0.0
  %1253 = vmatmul.mubr.f32.gmra.mrb[0].mxu0 %v1186
  %v1254 = vpop.f32.mrb[0].mxu0
  %v1255 = vadd.f32 0.0, %v1254
  %v1256 = vpop.f32.mrb[0].mxu0
  %1257 = vdwg.mxu0
  %v1259 = vrot.slane %v1255, 2
  %v1261 = vadd.f32 %v940, %v1259
  %v1262 = vtanh.pop %v1261
  %1263 = vst.msk [vmem:[#allocation3] sm:$0xc0] %vm537, %v1262
  %v1265 = vrot.slane %v1262, 6
  %v1266 = vsel %vm219, %v1265, 0
  %1268 = vmatprep.subr.mxu0 0.0
  %1269 = vmatpush1.msra.mxu0 %v950
  %1270 = vmatprep.subr.mxu0 0.0
  %1271 = vmatpush1.msra.mxu0 0.0
  %1272 = vmatprep.subr.mxu0 0.0
  %1273 = vmatpush1.msra.mxu0 0.0
  %1274 = vmatprep.subr.mxu0 0.0
  %1275 = vmatpush1.msra.mxu0 0.0
  %1276 = vmatprep.subr.mxu0 0.0
  %1277 = vmatpush1.msra.mxu0 0.0
  %1278 = vmatprep.subr.mxu0 0.0
  %1279 = vmatpush1.msra.mxu0 0.0
  %1280 = vmatprep.subr.mxu0 0.0
  %1281 = vmatpush1.msra.mxu0 0.0
  %1282 = vmatprep.subr.mxu0 0.0
  %1283 = vmatpush1.msra.mxu0 0.0
  %1284 = vmatprep.subr.mxu0 0.0
  %1285 = vmatpush1.msra.mxu0 0.0
  %1286 = vmatprep.subr.mxu0 0.0
  %1287 = vmatpush1.msra.mxu0 0.0
  %1288 = vmatprep.subr.mxu0 0.0
  %1289 = vmatpush1.msra.mxu0 0.0
  %1290 = vmatprep.subr.mxu0 0.0
  %1291 = vmatpush1.msra.mxu0 0.0
  %1292 = vmatprep.subr.mxu0 0.0
  %1293 = vmatpush1.msra.mxu0 0.0
  %1294 = vmatprep.subr.mxu0 0.0
  %1295 = vmatpush1.msra.mxu0 0.0
  %1296 = vmatprep.subr.mxu0 0.0
  %1297 = vmatpush1.msra.mxu0 0.0
  %1298 = vmatprep.subr.mxu0 0.0
  %1299 = vmatpush1.msra.mxu0 0.0
  %1300 = vmatprep.subr.mxu0 0.0
  %1301 = vmatpush1.msra.mxu0 0.0
  %1302 = vmatprep.subr.mxu0 0.0
  %1303 = vmatpush1.msra.mxu0 0.0
  %1304 = vmatprep.subr.mxu0 0.0
  %1305 = vmatpush1.msra.mxu0 0.0
  %1306 = vmatprep.subr.mxu0 0.0
  %1307 = vmatpush1.msra.mxu0 0.0
  %1308 = vmatprep.subr.mxu0 0.0
  %1309 = vmatpush1.msra.mxu0 0.0
  %1310 = vmatprep.subr.mxu0 0.0
  %1311 = vmatpush1.msra.mxu0 0.0
  %1312 = vmatprep.subr.mxu0 0.0
  %1313 = vmatpush1.msra.mxu0 0.0
  %1314 = vmatprep.subr.mxu0 0.0
  %1315 = vmatpush1.msra.mxu0 0.0
  %1316 = vmatprep.subr.mxu0 0.0
  %1317 = vmatpush1.msra.mxu0 0.0
  %1318 = vmatprep.subr.mxu0 0.0
  %1319 = vmatpush1.msra.mxu0 0.0
  %1320 = vmatprep.subr.mxu0 0.0
  %1321 = vmatpush1.msra.mxu0 0.0
  %1322 = vmatprep.subr.mxu0 0.0
  %1323 = vmatpush1.msra.mxu0 0.0
  %1324 = vmatprep.subr.mxu0 0.0
  %1325 = vmatpush1.msra.mxu0 0.0
  %1326 = vmatprep.subr.mxu0 0.0
  %1327 = vmatpush1.msra.mxu0 0.0
  %1328 = vmatprep.subr.mxu0 0.0
  %1329 = vmatpush1.msra.mxu0 0.0
  %1330 = vmatprep.subr.mxu0 0.0
  %1331 = vmatpush1.msra.mxu0 0.0
  %1332 = vmatprep.mubr.f32.mxu0 0.0
  %1333 = vmatmul.mubr.f32.gmra.mrb[0].mxu0 %v1266
  %v1334 = vpop.f32.mrb[0].mxu0
  %v1335 = vadd.f32 0.0, %v1334
  %v1336 = vpop.f32.mrb[0].mxu0
  %1337 = vdwg.mxu0
  %v1338 = vadd.f32 %v945, %v1335
  %v1339 = vtanh.pop %v1338
  %1340 = vst.msk [vmem:[#allocation3 + $0x8] sm:$0x3] %vm295, %v1339
  %v1342 = vsel %vm219, %v1339, 0
  %1344 = vmatprep.subr.mxu0 0.0
  %1345 = vmatpush1.msra.mxu0 %v950
  %1346 = vmatprep.subr.mxu0 0.0
  %1347 = vmatpush1.msra.mxu0 0.0
  %1348 = vmatprep.subr.mxu0 0.0
  %1349 = vmatpush1.msra.mxu0 0.0
  %1350 = vmatprep.subr.mxu0 0.0
  %1351 = vmatpush1.msra.mxu0 0.0
  %1352 = vmatprep.subr.mxu0 0.0
  %1353 = vmatpush1.msra.mxu0 0.0
  %1354 = vmatprep.subr.mxu0 0.0
  %1355 = vmatpush1.msra.mxu0 0.0
  %1356 = vmatprep.subr.mxu0 0.0
  %1357 = vmatpush1.msra.mxu0 0.0
  %1358 = vmatprep.subr.mxu0 0.0
  %1359 = vmatpush1.msra.mxu0 0.0
  %1360 = vmatprep.subr.mxu0 0.0
  %1361 = vmatpush1.msra.mxu0 0.0
  %1362 = vmatprep.subr.mxu0 0.0
  %1363 = vmatpush1.msra.mxu0 0.0
  %1364 = vmatprep.subr.mxu0 0.0
  %1365 = vmatpush1.msra.mxu0 0.0
  %1366 = vmatprep.subr.mxu0 0.0
  %1367 = vmatpush1.msra.mxu0 0.0
  %1368 = vmatprep.subr.mxu0 0.0
  %1369 = vmatpush1.msra.mxu0 0.0
  %1370 = vmatprep.subr.mxu0 0.0
  %1371 = vmatpush1.msra.mxu0 0.0
  %1372 = vmatprep.subr.mxu0 0.0
  %1373 = vmatpush1.msra.mxu0 0.0
  %1374 = vmatprep.subr.mxu0 0.0
  %1375 = vmatpush1.msra.mxu0 0.0
  %1376 = vmatprep.subr.mxu0 0.0
  %1377 = vmatpush1.msra.mxu0 0.0
  %1378 = vmatprep.subr.mxu0 0.0
  %1379 = vmatpush1.msra.mxu0 0.0
  %1380 = vmatprep.subr.mxu0 0.0
  %1381 = vmatpush1.msra.mxu0 0.0
  %1382 = vmatprep.subr.mxu0 0.0
  %1383 = vmatpush1.msra.mxu0 0.0
  %1384 = vmatprep.subr.mxu0 0.0
  %1385 = vmatpush1.msra.mxu0 0.0
  %1386 = vmatprep.subr.mxu0 0.0
  %1387 = vmatpush1.msra.mxu0 0.0
  %1388 = vmatprep.subr.mxu0 0.0
  %1389 = vmatpush1.msra.mxu0 0.0
  %1390 = vmatprep.subr.mxu0 0.0
  %1391 = vmatpush1.msra.mxu0 0.0
  %1392 = vmatprep.subr.mxu0 0.0
  %1393 = vmatpush1.msra.mxu0 0.0
  %1394 = vmatprep.subr.mxu0 0.0
  %1395 = vmatpush1.msra.mxu0 0.0
  %1396 = vmatprep.subr.mxu0 0.0
  %1397 = vmatpush1.msra.mxu0 0.0
  %1398 = vmatprep.subr.mxu0 0.0
  %1399 = vmatpush1.msra.mxu0 0.0
  %1400 = vmatprep.subr.mxu0 0.0
  %1401 = vmatpush1.msra.mxu0 0.0
  %1402 = vmatprep.subr.mxu0 0.0
  %1403 = vmatpush1.msra.mxu0 0.0
  %1404 = vmatprep.subr.mxu0 0.0
  %1405 = vmatpush1.msra.mxu0 0.0
  %1406 = vmatprep.subr.mxu0 0.0
  %1407 = vmatpush1.msra.mxu0 0.0
  %1408 = vmatprep.mubr.f32.mxu0 0.0
  %1409 = vmatmul.mubr.f32.gmra.mrb[0].mxu0 %v1342
  %v1410 = vpop.f32.mrb[0].mxu0
  %v1411 = vadd.f32 0.0, %v1410
  %v1412 = vpop.f32.mrb[0].mxu0
  %1413 = vdwg.mxu0
  %v1415 = vrot.slane %v1411, 6
  %v1417 = vadd.f32 %v945, %v1415
  %v1418 = vtanh.pop %v1417
  %1419 = vst.msk [vmem:[#allocation3 + $0x8] sm:$0xc] %vm375, %v1418
  %v1421 = vrot.slane %v1418, 2
  %v1422 = vsel %vm219, %v1421, 0
  %1424 = vmatprep.subr.mxu0 0.0
  %1425 = vmatpush1.msra.mxu0 %v950
  %1426 = vmatprep.subr.mxu0 0.0
  %1427 = vmatpush1.msra.mxu0 0.0
  %1428 = vmatprep.subr.mxu0 0.0
  %1429 = vmatpush1.msra.mxu0 0.0
  %1430 = vmatprep.subr.mxu0 0.0
  %1431 = vmatpush1.msra.mxu0 0.0
  %1432 = vmatprep.subr.mxu0 0.0
  %1433 = vmatpush1.msra.mxu0 0.0
  %1434 = vmatprep.subr.mxu0 0.0
  %1435 = vmatpush1.msra.mxu0 0.0
  %1436 = vmatprep.subr.mxu0 0.0
  %1437 = vmatpush1.msra.mxu0 0.0
  %1438 = vmatprep.subr.mxu0 0.0
  %1439 = vmatpush1.msra.mxu0 0.0
  %1440 = vmatprep.subr.mxu0 0.0
  %1441 = vmatpush1.msra.mxu0 0.0
  %1442 = vmatprep.subr.mxu0 0.0
  %1443 = vmatpush1.msra.mxu0 0.0
  %1444 = vmatprep.subr.mxu0 0.0
  %1445 = vmatpush1.msra.mxu0 0.0
  %1446 = vmatprep.subr.mxu0 0.0
  %1447 = vmatpush1.msra.mxu0 0.0
  %1448 = vmatprep.subr.mxu0 0.0
  %1449 = vmatpush1.msra.mxu0 0.0
  %1450 = vmatprep.subr.mxu0 0.0
  %1451 = vmatpush1.msra.mxu0 0.0
  %1452 = vmatprep.subr.mxu0 0.0
  %1453 = vmatpush1.msra.mxu0 0.0
  %1454 = vmatprep.subr.mxu0 0.0
  %1455 = vmatpush1.msra.mxu0 0.0
  %1456 = vmatprep.subr.mxu0 0.0
  %1457 = vmatpush1.msra.mxu0 0.0
  %1458 = vmatprep.subr.mxu0 0.0
  %1459 = vmatpush1.msra.mxu0 0.0
  %1460 = vmatprep.subr.mxu0 0.0
  %1461 = vmatpush1.msra.mxu0 0.0
  %1462 = vmatprep.subr.mxu0 0.0
  %1463 = vmatpush1.msra.mxu0 0.0
  %1464 = vmatprep.subr.mxu0 0.0
  %1465 = vmatpush1.msra.mxu0 0.0
  %1466 = vmatprep.subr.mxu0 0.0
  %1467 = vmatpush1.msra.mxu0 0.0
  %1468 = vmatprep.subr.mxu0 0.0
  %1469 = vmatpush1.msra.mxu0 0.0
  %1470 = vmatprep.subr.mxu0 0.0
  %1471 = vmatpush1.msra.mxu0 0.0
  %1472 = vmatprep.subr.mxu0 0.0
  %1473 = vmatpush1.msra.mxu0 0.0
  %1474 = vmatprep.subr.mxu0 0.0
  %1475 = vmatpush1.msra.mxu0 0.0
  %1476 = vmatprep.subr.mxu0 0.0
  %1477 = vmatpush1.msra.mxu0 0.0
  %1478 = vmatprep.subr.mxu0 0.0
  %1479 = vmatpush1.msra.mxu0 0.0
  %1480 = vmatprep.subr.mxu0 0.0
  %1481 = vmatpush1.msra.mxu0 0.0
  %1482 = vmatprep.subr.mxu0 0.0
  %1483 = vmatpush1.msra.mxu0 0.0
  %1484 = vmatprep.subr.mxu0 0.0
  %1485 = vmatpush1.msra.mxu0 0.0
  %1486 = vmatprep.subr.mxu0 0.0
  %1487 = vmatpush1.msra.mxu0 0.0
  %1488 = vmatprep.mubr.f32.mxu0 0.0
  %1489 = vmatmul.mubr.f32.gmra.mrb[0].mxu0 %v1422
  %v1490 = vpop.f32.mrb[0].mxu0
  %v1491 = vadd.f32 0.0, %v1490
  %v1492 = vpop.f32.mrb[0].mxu0
  %1493 = vdwg.mxu0
  %v1495 = vrot.slane %v1491, 4
  %v1497 = vadd.f32 %v945, %v1495
  %v1498 = vtanh.pop %v1497
  %1499 = vst.msk [vmem:[#allocation3 + $0x8] sm:$0x30] %vm456, %v1498
  %v1501 = vrot.slane %v1498, 4
  %v1502 = vsel %vm219, %v1501, 0
  %1504 = vmatprep.subr.mxu0 0.0
  %1505 = vmatpush1.msra.mxu0 %v950
  %1506 = vmatprep.subr.mxu0 0.0
  %1507 = vmatpush1.msra.mxu0 0.0
  %1508 = vmatprep.subr.mxu0 0.0
  %1509 = vmatpush1.msra.mxu0 0.0
  %1510 = vmatprep.subr.mxu0 0.0
  %1511 = vmatpush1.msra.mxu0 0.0
  %1512 = vmatprep.subr.mxu0 0.0
  %1513 = vmatpush1.msra.mxu0 0.0
  %1514 = vmatprep.subr.mxu0 0.0
  %1515 = vmatpush1.msra.mxu0 0.0
  %1516 = vmatprep.subr.mxu0 0.0
  %1517 = vmatpush1.msra.mxu0 0.0
  %1518 = vmatprep.subr.mxu0 0.0
  %1519 = vmatpush1.msra.mxu0 0.0
  %1520 = vmatprep.subr.mxu0 0.0
  %1521 = vmatpush1.msra.mxu0 0.0
  %1522 = vmatprep.subr.mxu0 0.0
  %1523 = vmatpush1.msra.mxu0 0.0
  %1524 = vmatprep.subr.mxu0 0.0
  %1525 = vmatpush1.msra.mxu0 0.0
  %1526 = vmatprep.subr.mxu0 0.0
  %1527 = vmatpush1.msra.mxu0 0.0
  %1528 = vmatprep.subr.mxu0 0.0
  %1529 = vmatpush1.msra.mxu0 0.0
  %1530 = vmatprep.subr.mxu0 0.0
  %1531 = vmatpush1.msra.mxu0 0.0
  %1532 = vmatprep.subr.mxu0 0.0
  %1533 = vmatpush1.msra.mxu0 0.0
  %1534 = vmatprep.subr.mxu0 0.0
  %1535 = vmatpush1.msra.mxu0 0.0
  %1536 = vmatprep.subr.mxu0 0.0
  %1537 = vmatpush1.msra.mxu0 0.0
  %1538 = vmatprep.subr.mxu0 0.0
  %1539 = vmatpush1.msra.mxu0 0.0
  %1540 = vmatprep.subr.mxu0 0.0
  %1541 = vmatpush1.msra.mxu0 0.0
  %1542 = vmatprep.subr.mxu0 0.0
  %1543 = vmatpush1.msra.mxu0 0.0
  %1544 = vmatprep.subr.mxu0 0.0
  %1545 = vmatpush1.msra.mxu0 0.0
  %1546 = vmatprep.subr.mxu0 0.0
  %1547 = vmatpush1.msra.mxu0 0.0
  %1548 = vmatprep.subr.mxu0 0.0
  %1549 = vmatpush1.msra.mxu0 0.0
  %1550 = vmatprep.subr.mxu0 0.0
  %1551 = vmatpush1.msra.mxu0 0.0
  %1552 = vmatprep.subr.mxu0 0.0
  %1553 = vmatpush1.msra.mxu0 0.0
  %1554 = vmatprep.subr.mxu0 0.0
  %1555 = vmatpush1.msra.mxu0 0.0
  %1556 = vmatprep.subr.mxu0 0.0
  %1557 = vmatpush1.msra.mxu0 0.0
  %1558 = vmatprep.subr.mxu0 0.0
  %1559 = vmatpush1.msra.mxu0 0.0
  %1560 = vmatprep.subr.mxu0 0.0
  %1561 = vmatpush1.msra.mxu0 0.0
  %1562 = vmatprep.subr.mxu0 0.0
  %1563 = vmatpush1.msra.mxu0 0.0
  %1564 = vmatprep.subr.mxu0 0.0
  %1565 = vmatpush1.msra.mxu0 0.0
  %1566 = vmatprep.subr.mxu0 0.0
  %1567 = vmatpush1.msra.mxu0 0.0
  %1568 = vmatprep.mubr.f32.mxu0 0.0
  %1569 = vmatmul.mubr.f32.gmra.mrb[0].mxu0 %v1502
  %v1570 = vpop.f32.mrb[0].mxu0
  %v1571 = vadd.f32 0.0, %v1570
  %v1572 = vpop.f32.mrb[0].mxu0
  %1573 = vdwg.mxu0
  %v1575 = vrot.slane %v1571, 2
  %v1577 = vadd.f32 %v945, %v1575
  %v1578 = vtanh.pop %v1577
  %1579 = vst.msk [vmem:[#allocation3 + $0x8] sm:$0xc0] %vm537, %v1578
  %v1580 = vld [vmem:[#allocation3] sm:$0xff]
  %v1581 = vld [vmem:[#allocation3 + $0x8] sm:$0xff]
  %v1582 = vlaneseq
  %v1583 = vshrl.u32 %v1582, 7
  %v1584 = vsub.s32 0, %v1583
  %v1585 = vrot.slane %v17, %v1584
  %v1587 = vsel %vm219, %v1580, 0
  %v1590 = vsel %vm219, %v1581, 0
  %1592 = vmatprep.subr.mxu0 0.0
  %1593 = vmatpush1.msra.mxu0 %v16
  %1594 = vmatprep.subr.mxu0 0.0
  %1595 = vmatpush1.msra.mxu0 0.0
  %1596 = vmatprep.subr.mxu0 0.0
  %1597 = vmatpush1.msra.mxu0 0.0
  %1598 = vmatprep.subr.mxu0 0.0
  %1599 = vmatpush1.msra.mxu0 0.0
  %1600 = vmatprep.subr.mxu0 0.0
  %1601 = vmatpush1.msra.mxu0 0.0
  %1602 = vmatprep.subr.mxu0 0.0
  %1603 = vmatpush1.msra.mxu0 0.0
  %1604 = vmatprep.subr.mxu0 0.0
  %1605 = vmatpush1.msra.mxu0 0.0
  %1606 = vmatprep.subr.mxu0 0.0
  %1607 = vmatpush1.msra.mxu0 0.0
  %1608 = vmatprep.subr.mxu0 0.0
  %1609 = vmatpush1.msra.mxu0 0.0
  %1610 = vmatprep.subr.mxu0 0.0
  %1611 = vmatpush1.msra.mxu0 0.0
  %1612 = vmatprep.subr.mxu0 0.0
  %1613 = vmatpush1.msra.mxu0 0.0
  %1614 = vmatprep.subr.mxu0 0.0
  %1615 = vmatpush1.msra.mxu0 0.0
  %1616 = vmatprep.subr.mxu0 0.0
  %1617 = vmatpush1.msra.mxu0 0.0
  %1618 = vmatprep.subr.mxu0 0.0
  %1619 = vmatpush1.msra.mxu0 0.0
  %1620 = vmatprep.subr.mxu0 0.0
  %1621 = vmatpush1.msra.mxu0 0.0
  %1622 = vmatprep.subr.mxu0 0.0
  %1623 = vmatpush1.msra.mxu0 0.0
  %1624 = vmatprep.subr.mxu0 0.0
  %1625 = vmatpush1.msra.mxu0 0.0
  %1626 = vmatprep.subr.mxu0 0.0
  %1627 = vmatpush1.msra.mxu0 0.0
  %1628 = vmatprep.subr.mxu0 0.0
  %1629 = vmatpush1.msra.mxu0 0.0
  %1630 = vmatprep.subr.mxu0 0.0
  %1631 = vmatpush1.msra.mxu0 0.0
  %1632 = vmatprep.subr.mxu0 0.0
  %1633 = vmatpush1.msra.mxu0 0.0
  %1634 = vmatprep.subr.mxu0 0.0
  %1635 = vmatpush1.msra.mxu0 0.0
  %1636 = vmatprep.subr.mxu0 0.0
  %1637 = vmatpush1.msra.mxu0 0.0
  %1638 = vmatprep.subr.mxu0 0.0
  %1639 = vmatpush1.msra.mxu0 0.0
  %1640 = vmatprep.subr.mxu0 0.0
  %1641 = vmatpush1.msra.mxu0 0.0
  %1642 = vmatprep.subr.mxu0 0.0
  %1643 = vmatpush1.msra.mxu0 0.0
  %1644 = vmatprep.subr.mxu0 0.0
  %1645 = vmatpush1.msra.mxu0 0.0
  %1646 = vmatprep.subr.mxu0 0.0
  %1647 = vmatpush1.msra.mxu0 0.0
  %1648 = vmatprep.subr.mxu0 0.0
  %1649 = vmatpush1.msra.mxu0 0.0
  %1650 = vmatprep.subr.mxu0 0.0
  %1651 = vmatpush1.msra.mxu0 0.0
  %1652 = vmatprep.subr.mxu0 0.0
  %1653 = vmatpush1.msra.mxu0 0.0
  %1654 = vmatprep.subr.mxu0 0.0
  %1655 = vmatpush1.msra.mxu0 0.0
  %1656 = vmatprep.mubr.f32.mxu0 0.0
  %1657 = vmatmul.mubr.f32.gmra.mrb[0].mxu0 %v1587
  %v1658 = vpop.f32.mrb[0].mxu0
  %v1659 = vadd.f32 %v1585, %v1658
  %v1660 = vpop.f32.mrb[0].mxu0
  %1661 = vmatprep.mubr.f32.mxu0 0.0
  %1662 = vmatmul.mubr.f32.gmra.mrb[0].mxu0 %v1590
  %v1663 = vpop.f32.mrb[0].mxu0
  %v1664 = vadd.f32 %v1585, %v1663
  %v1665 = vpop.f32.mrb[0].mxu0
  %1666 = vdwg.mxu0
  %1667 = vst.msk [vmem:[%s2] sm:$0xff] %vm34, %v1659
  %1668 = vst.msk [vmem:[%s2 + $0x8] sm:$0xff] %vm34, %v1664
  // Predicated region
  $region10: #{tpu_custom_call.1} parent=0 // pred_check
    _
  $region11: #{tpu_custom_call.1} parent=0 // pred_check_branch
    %1670 = sbr.rel (0) target = $region13
  $region12: #{tpu_custom_call.1} parent=0 // pred_region
    _
  $region13: #{tpu_custom_call.1} parent=0 // pred_fallthru
    _
  // Predicated region
  $region14: #{tpu_custom_call.1} parent=0 // pred_check
    _
  $region15: #{tpu_custom_call.1} parent=0 // pred_check_branch
    %1672 = sbr.rel (0) target = $region17
  $region16: #{tpu_custom_call.1} parent=0 // pred_region
    _
  $region17: #{tpu_custom_call.1} parent=0 // pred_fallthru
    _

</llo_original>
